<compile_context>
chip_gen: v7x
topology: tpu7x:2x2x1
jax: 0.10.0
libtpu: 0.0.40
codegen_flags: <defaults>
</compile_context>

<pallas_src>
import functools

import jax
import jax.numpy as jnp
from jax.experimental import pallas as pl
from jax.experimental.pallas import tpu as pltpu


_MXU_MIN_CIN = 8            # use the MXU for project_in at/above this many input channels
_SQRT_HALF = 0.7071067811865476


def _round_up(x, m):
    return (x + m - 1) // m * m


def gated_qdwconv_kernel(x_ref, pa_ref, pb_ref, out_ref, *, W, Cin):
    # x_ref:   (1, 1, Cin, Lh)  halo'd row window of one image, flattened spatial on lanes
    #                           (Lh = (TH+2)*W rounded up to a multiple of 128; tail is zero).
    # pa_ref:  (F, Cin+9+2)     packed params for the gelu half:  [ w1 | 3x3 taps | b1 | bdw ]
    # pb_ref:  (F, Cin+9+2)     packed params for the gate half.
    # out_ref: (1, F, TH*W)     gated output tile (lane-dense store).
    F = out_ref.shape[1]
    TW = out_ref.shape[2]
    Lh = x_ref.shape[3]
    TH = TW // W
    lh_real = (TH + 2) * W            # un-padded halo'd length

    t = pl.program_id(1)
    T = pl.num_programs(1)

    xh = x_ref[0, 0].astype(jnp.float32)                         # (Cin, Lh)

    lane = jax.lax.broadcasted_iota(jnp.int32, (1, Lh), 1)
    col = lane % W                                               # image column of each lane
    # Rows of the halo window that must behave as zero padding for the depthwise conv:
    # the top halo row on the first tile, the bottom halo row on the last tile, plus the
    # lane-pad tail.  (project_in of a zero-padded input row is the bias, not zero, so this
    # mask must be applied after the bias add.)
    lo = jnp.where(t == 0, W, 0)
    hi = jnp.where(t == T - 1, lh_real - W, lh_real)
    row_ok = (lane >= lo) & (lane < hi)
    left_ok = col >= 1                                           # dx=0 taps read column-1
    right_ok = col <= W - 2                                      # dx=2 taps read column+1

    def half(p_ref):
        w1 = p_ref[:, 0:Cin].astype(jnp.float32)                 # (F, Cin)
        wdw = p_ref[:, Cin:Cin + 9].astype(jnp.float32)          # (F, 9), tap index = dy*3+dx
        b1 = p_ref[:, Cin + 9:Cin + 10].astype(jnp.float32)      # (F, 1)
        bdw = p_ref[:, Cin + 10:Cin + 11].astype(jnp.float32)    # (F, 1)

        # --- project_in (1x1 conv) ------------------------------------------------------
        if Cin >= _MXU_MIN_CIN:
            y = jnp.dot(w1, xh, preferred_element_type=jnp.float32)    # MXU
        else:
            y = jnp.zeros((F, Lh), jnp.float32)                        # VPU path for tiny Cin
            for c in range(Cin):
                y = y + w1[:, c:c + 1] * xh[c:c + 1, :]
        y = y + b1
        y = jnp.where(row_ok, y, 0.0)

        # --- depthwise 3x3, stride 1, "same" padding ------------------------------------
        # Column-shifted operands, built once per dx and shared across the three dy taps.
        z0 = jnp.where(left_ok, pltpu.roll(y, 1, axis=1), 0.0)         # value at column-1
        z2 = jnp.where(right_ok, pltpu.roll(y, Lh - 1, axis=1), 0.0)   # value at column+1
        zs = (z0, y, z2)

        # Output position j (in [0, TH*W)) needs the halo value at j + dy*W + (dx-1), i.e.
        # roll(z_dx, -dy*W)[j]; any wrap-around only lands on masked or discarded lanes.
        acc = zs[0] * wdw[:, 0:1] + zs[1] * wdw[:, 1:2] + zs[2] * wdw[:, 2:3]     # dy = 0
        for dy in (1, 2):
            shift = Lh - dy * W
            for dx in range(3):
                tap = dy * 3 + dx
                acc = acc + pltpu.roll(zs[dx], shift, axis=1) * wdw[:, tap:tap + 1]
        return acc[:, :TW] + bdw                                   # aligned center extract

    a1 = half(pa_ref)
    a2 = half(pb_ref)

    # Exact erf GELU (matches torch's default).
    g = 0.5 * a1 * (1.0 + jax.lax.erf(a1 * jnp.float32(_SQRT_HALF)))
    out_ref[0] = (g * a2).astype(out_ref.dtype)


def _pick_block_rows(H, W, Cin, F, budget_bytes=20 << 20):
    """Largest row-tile dividing H that keeps the per-step live set under ~20 MiB (v7x-safe)
    and, when possible, keeps the output tile a multiple of 128 lanes."""
    best_th, best_aligned = 1, False
    for th in range(1, H + 1):
        if H % th:
            continue
        lh = _round_up((th + 2) * W, 128)
        # double-buffered in/out blocks + ~8 f32 (F, lh) temporaries across the two halves
        need = 4 * (2 * Cin * lh + 2 * F * th * W + 8 * F * lh)
        if need > budget_bytes and th > 1:
            continue
        aligned = (th * W) % 128 == 0 or th == H
        if (aligned, th) >= (best_aligned, best_th):
            best_th, best_aligned = th, aligned
    return best_th


@functools.partial(jax.jit, static_argnames=("block_rows",))
def gated_qdwconv(x_nchw, w1, b1, wdw, bdw, *, block_rows=None):
    """x_nchw: (N, Cin, H, W); w1: (Cin, C2); b1: (C2,); wdw: (3, 3, C2); bdw: (C2,).
    Returns (N, hidden_features, H, W), matching the PyTorch module's forward."""
    N, Cin, H, W = x_nchw.shape
    C2 = w1.shape[1]
    F = C2 // 2

    TH = _pick_block_rows(H, W, Cin, F) if block_rows is None else int(block_rows)
    if H % TH:
        raise ValueError(f"block_rows={TH} must divide H={H}")
    T = H // TH
    TW = TH * W
    lh_real = (TH + 2) * W
    Lh = _round_up(lh_real, 128)      # lane-dense halo window

    # --- layout plumbing in the wrapper (data movement only, no compute hoisted) ----------
    # One-row halo per tile taken from the zero-padded image; the kernel re-masks halo rows
    # that are pure zero padding.
    xp = jnp.pad(x_nchw, ((0, 0), (0, 0), (1, 1), (0, 0)))
    xw = jnp.stack([xp[:, :, i * TH:i * TH + TH + 2, :] for i in range(T)], axis=1)
    xw = xw.reshape(N, T, Cin, lh_real)
    if Lh != lh_real:
        xw = jnp.pad(xw, ((0, 0), (0, 0), (0, 0), (0, Lh - lh_real)))

    # Pack all per-channel parameters into one (F, Cin+9+2) array per gate half:
    # columns = [ project_in weight | 3x3 taps (dy*3+dx) | project_in bias | dwconv bias ].
    w1_t = jnp.transpose(w1)                          # (C2, Cin)
    wdw_ct = jnp.transpose(wdw.reshape(9, C2))        # (C2, 9)
    packed = jnp.concatenate(
        [w1_t, wdw_ct, b1.reshape(C2, 1), bdw.reshape(C2, 1)], axis=1).astype(jnp.float32)
    pa, pb = packed[:F], packed[F:]
    P = Cin + 9 + 2

    out_flat = pl.pallas_call(
        functools.partial(gated_qdwconv_kernel, W=W, Cin=Cin),
        out_shape=jax.ShapeDtypeStruct((N, F, H * W), x_nchw.dtype),
        grid_spec=pltpu.PrefetchScalarGridSpec(
            num_scalar_prefetch=0,
            grid=(N, T),
            in_specs=[
                pl.BlockSpec((1, 1, Cin, Lh), lambda b, t: (b, t, 0, 0)),
                pl.BlockSpec((F, P), lambda b, t: (0, 0)),
                pl.BlockSpec((F, P), lambda b, t: (0, 0)),
            ],
            out_specs=pl.BlockSpec((1, F, TW), lambda b, t: (b, 0, t)),
        ),
        compiler_params=pltpu.CompilerParams(
            dimension_semantics=("parallel", "parallel"),
            vmem_limit_bytes=32 * 1024 * 1024,
        ),
    )(xw, pa, pb)

    return out_flat.reshape(N, F, H, W)


def reference(x_nchw, w1, b1, wdw, bdw):
    """Pure-JAX reference matching the PyTorch forward."""
    x = jnp.transpose(x_nchw, (0, 2, 3, 1)).astype(jnp.float32)   # NHWC
    y = jnp.einsum("nhwc,cf->nhwf", x, w1,
                   precision=jax.lax.Precision.HIGHEST) + b1
    N, H, W, C2 = y.shape
    yp = jnp.pad(y, ((0, 0), (1, 1), (1, 1), (0, 0)))
    acc = jnp.zeros_like(y)
    for dy in range(3):
        for dx in range(3):
            acc = acc + yp[:, dy:dy + H, dx:dx + W, :] * wdw[dy, dx]
    acc = acc + bdw
    F = C2 // 2
    x1, x2 = acc[..., :F], acc[..., F:]
    g = 0.5 * x1 * (1.0 + jax.lax.erf(x1 * jnp.float32(_SQRT_HALF)))
    return jnp.transpose(g * x2, (0, 3, 1, 2))


if __name__ == "__main__":
    # Module config: dim=16, ffn_expansion_factor=2, bias=True  (Cin=16 -> MXU project_in path).
    dim, ffn_expansion_factor = 16, 2.0
    hidden = int(dim * ffn_expansion_factor)          # 32
    C2 = hidden * 2                                   # 64
    N, H, W = 2, 16, 16

    key = jax.random.PRNGKey(0)
    k_x, k_w1, k_b1, k_wdw, k_bdw = jax.random.split(key, 5)

    # Round x and the 1x1 weight to the bf16 grid so the check is insensitive to the MXU's f32
    # matmul mode (bf16 passes vs full f32): with bf16-exact inputs every mode gives the same
    # products, and accumulation stays f32.
    def bf16_exact(a):
        return a.astype(jnp.bfloat16).astype(jnp.float32)

    # Synthetic parameters (shapes follow the torch module's __init__):
    #  project_in: Conv2d(dim, C2, 1, bias=True)   -> w1 stored as (dim, C2), b1 (C2,)
    #  dwconv:     Conv2d(C2, C2, 3, groups=C2)    -> wdw stored as (3, 3, C2), bdw (C2,)
    x = bf16_exact(jax.random.normal(k_x, (N, dim, H, W), jnp.float32))
    w1 = bf16_exact(jax.random.normal(k_w1, (dim, C2), jnp.float32) * 0.2)
    b1 = jax.random.normal(k_b1, (C2,), jnp.float32) * 0.1
    wdw = jax.random.normal(k_wdw, (3, 3, C2), jnp.float32) * 0.2
    bdw = jax.random.normal(k_bdw, (C2,), jnp.float32) * 0.1

    # block_rows=8 -> 2 spatial tiles per image, grid (2 batch x 2 tiles) = 4 parallel steps,
    # output tile width 8*16 = 128 lanes (unmasked lane-dense stores).
    out = gated_qdwconv(x, w1, b1, wdw, bdw, block_rows=8)
    out = jax.block_until_ready(out)

    ref = reference(x, w1, b1, wdw, bdw)
    assert out.shape == (N, hidden, H, W), out.shape
    max_err = float(jnp.max(jnp.abs(out - ref)))
    assert jnp.allclose(out, ref, atol=2e-3, rtol=2e-3), max_err

    print("KERNEL_OK")
</pallas_src>

<mosaic_0001>
module attributes {stable_mosaic.version = 11 : i64} {
  func.func @gated_qdwconv_kernel(%arg0: i32, %arg1: i32, %arg2: memref<1x1x16x256xf32, #tpu.memory_space<vmem>>, %arg3: memref<32x27xf32, #tpu.memory_space<vmem>>, %arg4: memref<32x27xf32, #tpu.memory_space<vmem>>, %arg5: memref<1x32x128xf32, #tpu.memory_space<vmem>>) attributes {dimension_semantics = [#tpu.dimension_semantics<parallel>, #tpu.dimension_semantics<parallel>], iteration_bounds = array<i64: 2, 2>, scalar_prefetch = 0 : i64, scratch_operands = 0 : i64, tpu.core_type = #tpu.core_type<tc>, window_params = [{transform_indices = @transform_0, window_bounds = array<i64: 1, 1, 16, 256>}, {pipeline_mode = #tpu.pipeline_mode<synchronous>, transform_indices = @transform_1, window_bounds = array<i64: 32, 27>}, {pipeline_mode = #tpu.pipeline_mode<synchronous>, transform_indices = @transform_2, window_bounds = array<i64: 32, 27>}, {transform_indices = @transform_3, window_bounds = array<i64: 1, 32, 128>}]} {
    %c0 = arith.constant 0 : index
    %c0_0 = arith.constant 0 : index
    %c0_1 = arith.constant 0 : index
    %c0_2 = arith.constant 0 : index
    %0 = vector.load %arg2[%c0, %c0_0, %c0_1, %c0_2] : memref<1x1x16x256xf32, #tpu.memory_space<vmem>>, vector<1x1x16x256xf32>
    %1 = vector.shape_cast %0 : vector<1x1x16x256xf32> to vector<16x256xf32>
    %2 = tpu.iota {dimensions = array<i32: 1>} : vector<1x256xi32>
    %c16_i32 = arith.constant 16 : i32
    %c0_i32 = arith.constant 0 : i32
    %3 = arith.cmpi eq, %c16_i32, %c0_i32 : i32
    %c1_i32 = arith.constant 1 : i32
    %4 = arith.select %3, %c1_i32, %c16_i32 : i32
    %5 = vector.broadcast %4 : i32 to vector<1x256xi32>
    %6 = arith.remsi %2, %5 : vector<1x256xi32>
    %c0_i32_3 = arith.constant 0 : i32
    %7 = vector.broadcast %c0_i32_3 : i32 to vector<1x256xi32>
    %8 = arith.cmpi ne, %6, %7 : vector<1x256xi32>
    %c0_i32_4 = arith.constant 0 : i32
    %9 = vector.broadcast %c0_i32_4 : i32 to vector<1x256xi32>
    %10 = arith.cmpi slt, %6, %9 : vector<1x256xi32>
    %c0_i32_5 = arith.constant 0 : i32
    %11 = arith.cmpi slt, %4, %c0_i32_5 : i32
    %12 = vector.broadcast %11 : i1 to vector<1x256xi1>
    %13 = vector.broadcast %12 : vector<1x256xi1> to vector<1x256xi1>
    %14 = arith.xori %10, %13 : vector<1x256xi1>
    %15 = arith.andi %14, %8 : vector<1x256xi1>
    %16 = vector.broadcast %4 : i32 to vector<1x256xi32>
    %17 = arith.addi %6, %16 : vector<1x256xi32>
    %18 = arith.select %15, %17, %6 : vector<1x256xi1>, vector<1x256xi32>
    %c0_i32_6 = arith.constant 0 : i32
    %19 = arith.cmpi eq, %arg1, %c0_i32_6 : i32
    %c16_i32_7 = arith.constant 16 : i32
    %c0_i32_8 = arith.constant 0 : i32
    %20 = arith.select %19, %c16_i32_7, %c0_i32_8 : i32
    %c1_i32_9 = arith.constant 1 : i32
    %21 = arith.cmpi eq, %arg1, %c1_i32_9 : i32
    %c144_i32 = arith.constant 144 : i32
    %c160_i32 = arith.constant 160 : i32
    %22 = arith.select %21, %c144_i32, %c160_i32 : i32
    %23 = vector.broadcast %20 : i32 to vector<1x256xi32>
    %24 = arith.cmpi sge, %2, %23 : vector<1x256xi32>
    %25 = vector.broadcast %22 : i32 to vector<1x256xi32>
    %26 = arith.cmpi slt, %2, %25 : vector<1x256xi32>
    %27 = arith.andi %24, %26 : vector<1x256xi1>
    %c1_i32_10 = arith.constant 1 : i32
    %28 = vector.broadcast %c1_i32_10 : i32 to vector<1x256xi32>
    %29 = arith.cmpi sge, %18, %28 : vector<1x256xi32>
    %c14_i32 = arith.constant 14 : i32
    %30 = vector.broadcast %c14_i32 : i32 to vector<1x256xi32>
    %31 = arith.cmpi sle, %18, %30 : vector<1x256xi32>
    %c0_11 = arith.constant 0 : index
    %c0_12 = arith.constant 0 : index
    %32 = vector.load %arg3[%c0_11, %c0_12] : memref<32x27xf32, #tpu.memory_space<vmem>>, vector<32x16xf32>
    %c0_13 = arith.constant 0 : index
    %c16 = arith.constant 16 : index
    %33 = vector.load %arg3[%c0_13, %c16] : memref<32x27xf32, #tpu.memory_space<vmem>>, vector<32x9xf32>
    %c0_14 = arith.constant 0 : index
    %c25 = arith.constant 25 : index
    %34 = vector.load %arg3[%c0_14, %c25] : memref<32x27xf32, #tpu.memory_space<vmem>>, vector<32x1xf32>
    %c0_15 = arith.constant 0 : index
    %c26 = arith.constant 26 : index
    %35 = vector.load %arg3[%c0_15, %c26] : memref<32x27xf32, #tpu.memory_space<vmem>>, vector<32x1xf32>
    %cst = arith.constant dense<0.000000e+00> : vector<32x256xf32>
    %36 = tpu.matmul %32, %1, %cst {dimension_numbers = #tpu.dot_dimension_numbers<[1], [0], [0], [1], [0, 0, 1, 1], [], []>} : vector<32x16xf32>, vector<16x256xf32>, vector<32x256xf32> -> vector<32x256xf32>
    %37 = vector.broadcast %34 : vector<32x1xf32> to vector<32x256xf32>
    %38 = arith.addf %36, %37 : vector<32x256xf32>
    %cst_16 = arith.constant 0.000000e+00 : f32
    %39 = vector.shape_cast %27 : vector<1x256xi1> to vector<1x256xi1>
    %40 = vector.broadcast %39 : vector<1x256xi1> to vector<32x256xi1>
    %41 = vector.broadcast %cst_16 : f32 to vector<32x256xf32>
    %42 = arith.select %40, %38, %41 : vector<32x256xi1>, vector<32x256xf32>
    %c1_i32_17 = arith.constant 1 : i32
    %43 = tpu.dynamic_rotate %42 by %c1_i32_17 dim 1 : vector<32x256xf32>, i32 -> vector<32x256xf32>
    %cst_18 = arith.constant 0.000000e+00 : f32
    %44 = vector.shape_cast %29 : vector<1x256xi1> to vector<1x256xi1>
    %45 = vector.broadcast %44 : vector<1x256xi1> to vector<32x256xi1>
    %46 = vector.broadcast %cst_18 : f32 to vector<32x256xf32>
    %47 = arith.select %45, %43, %46 : vector<32x256xi1>, vector<32x256xf32>
    %c255_i32 = arith.constant 255 : i32
    %48 = tpu.dynamic_rotate %42 by %c255_i32 dim 1 : vector<32x256xf32>, i32 -> vector<32x256xf32>
    %cst_19 = arith.constant 0.000000e+00 : f32
    %49 = vector.shape_cast %31 : vector<1x256xi1> to vector<1x256xi1>
    %50 = vector.broadcast %49 : vector<1x256xi1> to vector<32x256xi1>
    %51 = vector.broadcast %cst_19 : f32 to vector<32x256xf32>
    %52 = arith.select %50, %48, %51 : vector<32x256xi1>, vector<32x256xf32>
    %53 = vector.extract_strided_slice %33 {offsets = [0, 0], sizes = [32, 1], strides = [1, 1]} : vector<32x9xf32> to vector<32x1xf32>
    %54 = vector.broadcast %53 : vector<32x1xf32> to vector<32x256xf32>
    %55 = arith.mulf %47, %54 : vector<32x256xf32>
    %56 = vector.extract_strided_slice %33 {offsets = [0, 1], sizes = [32, 1], strides = [1, 1]} : vector<32x9xf32> to vector<32x1xf32>
    %57 = vector.broadcast %56 : vector<32x1xf32> to vector<32x256xf32>
    %58 = arith.mulf %42, %57 : vector<32x256xf32>
    %59 = arith.addf %55, %58 : vector<32x256xf32>
    %60 = vector.extract_strided_slice %33 {offsets = [0, 2], sizes = [32, 1], strides = [1, 1]} : vector<32x9xf32> to vector<32x1xf32>
    %61 = vector.broadcast %60 : vector<32x1xf32> to vector<32x256xf32>
    %62 = arith.mulf %52, %61 : vector<32x256xf32>
    %63 = arith.addf %59, %62 : vector<32x256xf32>
    %c240_i32 = arith.constant 240 : i32
    %64 = tpu.dynamic_rotate %47 by %c240_i32 dim 1 : vector<32x256xf32>, i32 -> vector<32x256xf32>
    %65 = vector.extract_strided_slice %33 {offsets = [0, 3], sizes = [32, 1], strides = [1, 1]} : vector<32x9xf32> to vector<32x1xf32>
    %66 = vector.broadcast %65 : vector<32x1xf32> to vector<32x256xf32>
    %67 = arith.mulf %64, %66 : vector<32x256xf32>
    %68 = arith.addf %63, %67 : vector<32x256xf32>
    %c240_i32_20 = arith.constant 240 : i32
    %69 = tpu.dynamic_rotate %42 by %c240_i32_20 dim 1 : vector<32x256xf32>, i32 -> vector<32x256xf32>
    %70 = vector.extract_strided_slice %33 {offsets = [0, 4], sizes = [32, 1], strides = [1, 1]} : vector<32x9xf32> to vector<32x1xf32>
    %71 = vector.broadcast %70 : vector<32x1xf32> to vector<32x256xf32>
    %72 = arith.mulf %69, %71 : vector<32x256xf32>
    %73 = arith.addf %68, %72 : vector<32x256xf32>
    %c240_i32_21 = arith.constant 240 : i32
    %74 = tpu.dynamic_rotate %52 by %c240_i32_21 dim 1 : vector<32x256xf32>, i32 -> vector<32x256xf32>
    %75 = vector.extract_strided_slice %33 {offsets = [0, 5], sizes = [32, 1], strides = [1, 1]} : vector<32x9xf32> to vector<32x1xf32>
    %76 = vector.broadcast %75 : vector<32x1xf32> to vector<32x256xf32>
    %77 = arith.mulf %74, %76 : vector<32x256xf32>
    %78 = arith.addf %73, %77 : vector<32x256xf32>
    %c224_i32 = arith.constant 224 : i32
    %79 = tpu.dynamic_rotate %47 by %c224_i32 dim 1 : vector<32x256xf32>, i32 -> vector<32x256xf32>
    %80 = vector.extract_strided_slice %33 {offsets = [0, 6], sizes = [32, 1], strides = [1, 1]} : vector<32x9xf32> to vector<32x1xf32>
    %81 = vector.broadcast %80 : vector<32x1xf32> to vector<32x256xf32>
    %82 = arith.mulf %79, %81 : vector<32x256xf32>
    %83 = arith.addf %78, %82 : vector<32x256xf32>
    %c224_i32_22 = arith.constant 224 : i32
    %84 = tpu.dynamic_rotate %42 by %c224_i32_22 dim 1 : vector<32x256xf32>, i32 -> vector<32x256xf32>
    %85 = vector.extract_strided_slice %33 {offsets = [0, 7], sizes = [32, 1], strides = [1, 1]} : vector<32x9xf32> to vector<32x1xf32>
    %86 = vector.broadcast %85 : vector<32x1xf32> to vector<32x256xf32>
    %87 = arith.mulf %84, %86 : vector<32x256xf32>
    %88 = arith.addf %83, %87 : vector<32x256xf32>
    %c224_i32_23 = arith.constant 224 : i32
    %89 = tpu.dynamic_rotate %52 by %c224_i32_23 dim 1 : vector<32x256xf32>, i32 -> vector<32x256xf32>
    %90 = vector.extract_strided_slice %33 {offsets = [0, 8], sizes = [32, 1], strides = [1, 1]} : vector<32x9xf32> to vector<32x1xf32>
    %91 = vector.broadcast %90 : vector<32x1xf32> to vector<32x256xf32>
    %92 = arith.mulf %89, %91 : vector<32x256xf32>
    %93 = arith.addf %88, %92 : vector<32x256xf32>
    %94 = vector.extract_strided_slice %93 {offsets = [0, 0], sizes = [32, 128], strides = [1, 1]} : vector<32x256xf32> to vector<32x128xf32>
    %95 = vector.broadcast %35 : vector<32x1xf32> to vector<32x128xf32>
    %96 = arith.addf %94, %95 : vector<32x128xf32>
    %c0_24 = arith.constant 0 : index
    %c0_25 = arith.constant 0 : index
    %97 = vector.load %arg4[%c0_24, %c0_25] : memref<32x27xf32, #tpu.memory_space<vmem>>, vector<32x16xf32>
    %c0_26 = arith.constant 0 : index
    %c16_27 = arith.constant 16 : index
    %98 = vector.load %arg4[%c0_26, %c16_27] : memref<32x27xf32, #tpu.memory_space<vmem>>, vector<32x9xf32>
    %c0_28 = arith.constant 0 : index
    %c25_29 = arith.constant 25 : index
    %99 = vector.load %arg4[%c0_28, %c25_29] : memref<32x27xf32, #tpu.memory_space<vmem>>, vector<32x1xf32>
    %c0_30 = arith.constant 0 : index
    %c26_31 = arith.constant 26 : index
    %100 = vector.load %arg4[%c0_30, %c26_31] : memref<32x27xf32, #tpu.memory_space<vmem>>, vector<32x1xf32>
    %cst_32 = arith.constant dense<0.000000e+00> : vector<32x256xf32>
    %101 = tpu.matmul %97, %1, %cst_32 {dimension_numbers = #tpu.dot_dimension_numbers<[1], [0], [0], [1], [0, 0, 1, 1], [], []>} : vector<32x16xf32>, vector<16x256xf32>, vector<32x256xf32> -> vector<32x256xf32>
    %102 = vector.broadcast %99 : vector<32x1xf32> to vector<32x256xf32>
    %103 = arith.addf %101, %102 : vector<32x256xf32>
    %cst_33 = arith.constant 0.000000e+00 : f32
    %104 = vector.shape_cast %27 : vector<1x256xi1> to vector<1x256xi1>
    %105 = vector.broadcast %104 : vector<1x256xi1> to vector<32x256xi1>
    %106 = vector.broadcast %cst_33 : f32 to vector<32x256xf32>
    %107 = arith.select %105, %103, %106 : vector<32x256xi1>, vector<32x256xf32>
    %c1_i32_34 = arith.constant 1 : i32
    %108 = tpu.dynamic_rotate %107 by %c1_i32_34 dim 1 : vector<32x256xf32>, i32 -> vector<32x256xf32>
    %cst_35 = arith.constant 0.000000e+00 : f32
    %109 = vector.shape_cast %29 : vector<1x256xi1> to vector<1x256xi1>
    %110 = vector.broadcast %109 : vector<1x256xi1> to vector<32x256xi1>
    %111 = vector.broadcast %cst_35 : f32 to vector<32x256xf32>
    %112 = arith.select %110, %108, %111 : vector<32x256xi1>, vector<32x256xf32>
    %c255_i32_36 = arith.constant 255 : i32
    %113 = tpu.dynamic_rotate %107 by %c255_i32_36 dim 1 : vector<32x256xf32>, i32 -> vector<32x256xf32>
    %cst_37 = arith.constant 0.000000e+00 : f32
    %114 = vector.shape_cast %31 : vector<1x256xi1> to vector<1x256xi1>
    %115 = vector.broadcast %114 : vector<1x256xi1> to vector<32x256xi1>
    %116 = vector.broadcast %cst_37 : f32 to vector<32x256xf32>
    %117 = arith.select %115, %113, %116 : vector<32x256xi1>, vector<32x256xf32>
    %118 = vector.extract_strided_slice %98 {offsets = [0, 0], sizes = [32, 1], strides = [1, 1]} : vector<32x9xf32> to vector<32x1xf32>
    %119 = vector.broadcast %118 : vector<32x1xf32> to vector<32x256xf32>
    %120 = arith.mulf %112, %119 : vector<32x256xf32>
    %121 = vector.extract_strided_slice %98 {offsets = [0, 1], sizes = [32, 1], strides = [1, 1]} : vector<32x9xf32> to vector<32x1xf32>
    %122 = vector.broadcast %121 : vector<32x1xf32> to vector<32x256xf32>
    %123 = arith.mulf %107, %122 : vector<32x256xf32>
    %124 = arith.addf %120, %123 : vector<32x256xf32>
    %125 = vector.extract_strided_slice %98 {offsets = [0, 2], sizes = [32, 1], strides = [1, 1]} : vector<32x9xf32> to vector<32x1xf32>
    %126 = vector.broadcast %125 : vector<32x1xf32> to vector<32x256xf32>
    %127 = arith.mulf %117, %126 : vector<32x256xf32>
    %128 = arith.addf %124, %127 : vector<32x256xf32>
    %c240_i32_38 = arith.constant 240 : i32
    %129 = tpu.dynamic_rotate %112 by %c240_i32_38 dim 1 : vector<32x256xf32>, i32 -> vector<32x256xf32>
    %130 = vector.extract_strided_slice %98 {offsets = [0, 3], sizes = [32, 1], strides = [1, 1]} : vector<32x9xf32> to vector<32x1xf32>
    %131 = vector.broadcast %130 : vector<32x1xf32> to vector<32x256xf32>
    %132 = arith.mulf %129, %131 : vector<32x256xf32>
    %133 = arith.addf %128, %132 : vector<32x256xf32>
    %c240_i32_39 = arith.constant 240 : i32
    %134 = tpu.dynamic_rotate %107 by %c240_i32_39 dim 1 : vector<32x256xf32>, i32 -> vector<32x256xf32>
    %135 = vector.extract_strided_slice %98 {offsets = [0, 4], sizes = [32, 1], strides = [1, 1]} : vector<32x9xf32> to vector<32x1xf32>
    %136 = vector.broadcast %135 : vector<32x1xf32> to vector<32x256xf32>
    %137 = arith.mulf %134, %136 : vector<32x256xf32>
    %138 = arith.addf %133, %137 : vector<32x256xf32>
    %c240_i32_40 = arith.constant 240 : i32
    %139 = tpu.dynamic_rotate %117 by %c240_i32_40 dim 1 : vector<32x256xf32>, i32 -> vector<32x256xf32>
    %140 = vector.extract_strided_slice %98 {offsets = [0, 5], sizes = [32, 1], strides = [1, 1]} : vector<32x9xf32> to vector<32x1xf32>
    %141 = vector.broadcast %140 : vector<32x1xf32> to vector<32x256xf32>
    %142 = arith.mulf %139, %141 : vector<32x256xf32>
    %143 = arith.addf %138, %142 : vector<32x256xf32>
    %c224_i32_41 = arith.constant 224 : i32
    %144 = tpu.dynamic_rotate %112 by %c224_i32_41 dim 1 : vector<32x256xf32>, i32 -> vector<32x256xf32>
    %145 = vector.extract_strided_slice %98 {offsets = [0, 6], sizes = [32, 1], strides = [1, 1]} : vector<32x9xf32> to vector<32x1xf32>
    %146 = vector.broadcast %145 : vector<32x1xf32> to vector<32x256xf32>
    %147 = arith.mulf %144, %146 : vector<32x256xf32>
    %148 = arith.addf %143, %147 : vector<32x256xf32>
    %c224_i32_42 = arith.constant 224 : i32
    %149 = tpu.dynamic_rotate %107 by %c224_i32_42 dim 1 : vector<32x256xf32>, i32 -> vector<32x256xf32>
    %150 = vector.extract_strided_slice %98 {offsets = [0, 7], sizes = [32, 1], strides = [1, 1]} : vector<32x9xf32> to vector<32x1xf32>
    %151 = vector.broadcast %150 : vector<32x1xf32> to vector<32x256xf32>
    %152 = arith.mulf %149, %151 : vector<32x256xf32>
    %153 = arith.addf %148, %152 : vector<32x256xf32>
    %c224_i32_43 = arith.constant 224 : i32
    %154 = tpu.dynamic_rotate %117 by %c224_i32_43 dim 1 : vector<32x256xf32>, i32 -> vector<32x256xf32>
    %155 = vector.extract_strided_slice %98 {offsets = [0, 8], sizes = [32, 1], strides = [1, 1]} : vector<32x9xf32> to vector<32x1xf32>
    %156 = vector.broadcast %155 : vector<32x1xf32> to vector<32x256xf32>
    %157 = arith.mulf %154, %156 : vector<32x256xf32>
    %158 = arith.addf %153, %157 : vector<32x256xf32>
    %159 = vector.extract_strided_slice %158 {offsets = [0, 0], sizes = [32, 128], strides = [1, 1]} : vector<32x256xf32> to vector<32x128xf32>
    %160 = vector.broadcast %100 : vector<32x1xf32> to vector<32x128xf32>
    %161 = arith.addf %159, %160 : vector<32x128xf32>
    %cst_44 = arith.constant 5.000000e-01 : f32
    %162 = vector.broadcast %cst_44 : f32 to vector<32x128xf32>
    %163 = arith.mulf %162, %96 : vector<32x128xf32>
    %cst_45 = arith.constant 0.707106769 : f32
    %164 = vector.broadcast %cst_45 : f32 to vector<32x128xf32>
    %165 = arith.mulf %96, %164 : vector<32x128xf32>
    %166 = math.erf %165 : vector<32x128xf32>
    %cst_46 = arith.constant 1.000000e+00 : f32
    %167 = vector.broadcast %cst_46 : f32 to vector<32x128xf32>
    %168 = arith.addf %167, %166 : vector<32x128xf32>
    %169 = arith.mulf %163, %168 : vector<32x128xf32>
    %170 = arith.mulf %169, %161 : vector<32x128xf32>
    %c0_47 = arith.constant 0 : index
    %c0_48 = arith.constant 0 : index
    %c0_49 = arith.constant 0 : index
    %171 = vector.load %arg5[%c0_47, %c0_48, %c0_49] : memref<1x32x128xf32, #tpu.memory_space<vmem>>, vector<1x32x128xf32>
    %172 = vector.shape_cast %171 : vector<1x32x128xf32> to vector<32x128xf32>
    %173 = vector.shape_cast %170 : vector<32x128xf32> to vector<1x32x128xf32>
    tpu.vector_store %arg5[%c0_47, %c0_48, %c0_49], %173 {strides = array<i32>} : memref<1x32x128xf32, #tpu.memory_space<vmem>>, vector<1x32x128xf32>,
    return
  }
  func.func @transform_0(%arg0: i32, %arg1: i32) -> (i32, i32, i32, i32) {
    %c0_i32 = arith.constant 0 : i32
    %c0_i32_0 = arith.constant 0 : i32
    %c0_i32_1 = arith.constant 0 : i32
    return %arg0, %arg1, %c0_i32, %c0_i32_0 : i32, i32, i32, i32
  }
  func.func @transform_1(%arg0: i32, %arg1: i32) -> (i32, i32) {
    %c0_i32 = arith.constant 0 : i32
    %c0_i32_0 = arith.constant 0 : i32
    %c0_i32_1 = arith.constant 0 : i32
    return %c0_i32, %c0_i32_0 : i32, i32
  }
  func.func @transform_2(%arg0: i32, %arg1: i32) -> (i32, i32) {
    %c0_i32 = arith.constant 0 : i32
    %c0_i32_0 = arith.constant 0 : i32
    %c0_i32_1 = arith.constant 0 : i32
    return %c0_i32, %c0_i32_0 : i32, i32
  }
  func.func @transform_3(%arg0: i32, %arg1: i32) -> (i32, i32, i32) {
    %c0_i32 = arith.constant 0 : i32
    %c0_i32_0 = arith.constant 0 : i32
    return %arg0, %c0_i32, %arg1 : i32, i32, i32
  }
}

</mosaic_0001>

<llo_original>
// kernel: gated_qdwconv.1
$region0: #{gated_qdwconv.1}
  #allocation0 [shape = 'u32[]', space=smem, size = 0x4, offset = 0x4, fixed_abs, tag = 'smem constant byte address 0x4 - core index']
  #allocation1 [shape = 'u32[144,128]{1,0:T(1,128)}', space=vmem, size = 0x12000, scoped, tag = 'internal scratch']
  %s0 = inlined_call_operand.vmem [shape: f32[2,2,16,256], index: 0, kind: input, shape index: {}]
  %s1 = inlined_call_operand.vmem [shape: f32[32,27], index: 1, kind: input, shape index: {}]
  %s2 = inlined_call_operand.vmem [shape: f32[32,27], index: 2, kind: input, shape index: {}]
  %s3 = inlined_call_operand.vmem [shape: f32[2,32,256], index: 3, kind: output, shape index: {}]
  %s4 = sld [smem:[#allocation0]]
  $region79: #{gated_qdwconv.1} parent=0
    _
  %s6 = ssub.s32 1, %s4
  %s7 = scalar_select 0, %s6, %s4
  $region1: #{gated_qdwconv.1} parent=0
    #allocation2 [shape = 'u8[32768]{0}', space=vmem, size = 0x8000, scoped, tag = 'output window, operand 0']
    loop: start=0, step=1, limit=6
    $region2: #{gated_qdwconv.1} parent=1 // loop_pre_header
      _
    $region3: #{gated_qdwconv.1} parent=1 // loop_header
      %s9 = sphi 0, %s13
      %p10 = scmp.ge.s32.totalorder %s9, 6
      %s16 = sphi 0, %s28
      %s17 = sphi 0, %s24
      %s18 = sphi 0, %s16
      %s19 = sphi 0, %s17
      %s20 = sphi 0, %s18
      %s21 = sphi 0, %s19
      %s33 = sphi 0, %s35
      %s36 = sphi 0, %s33
      %s37 = sphi 0, %s36
      %s53 = sphi 0, %s37
      %s57 = sphi 0, %s57
      %s59 = sphi 0, %s57
      %s60 = sphi 0, %s59
      %s74 = sphi 0, %s60
      %s78 = sphi 0, %s78
      %s80 = sphi 0, %s78
      %s81 = sphi 0, %s80
      %s95 = sphi 0, %s81
      %s103 = sphi 0, %s105
      %s106 = sphi 0, %s103
      %s107 = sphi 0, %s106
      %s123 = sphi 0, %s107
    $region4: #{gated_qdwconv.1} parent=1 // loop_header_branch
      %12 = sbr.rel (%p10) target = $region8
    $region5: #{gated_qdwconv.1} parent=1 // loop_body
      %s14 = ssub.s32 %s9, 1
      %s15 = ssub.s32 %s9, 2
      %s22 = sadd.s32 1, %s17
      %p23 = scmp.ge.s32.totalorder %s22, 2
      %s24 = scalar_select %p23, 0, %s22
      %s25 = sadd.s32 1, %s16
      %s26 = scalar_select %p23, %s25, %s16
      %p27 = scmp.ge.s32.totalorder %s26, 2
      %s28 = scalar_select %p27, 0, %s26
      %s29 = ssub.s32 %s16, %s28
      %s30 = ssub.s32 %s17, %s24
      %s31 = sor.u32 %s29, %s30
      %p32 = scmp.eq.s32.totalorder %s31, 0
      %s34 = sadd.s32 %s33, 1
      %s35 = scalar_select %p32, %s33, %s34
      %p38 = pneg %p32
      %p39 = scmp.eq.s32.totalorder %s9, 3
      %p40 = por %p38, %p39
      %p41 = scmp.ne.s32.totalorder %s33, %s36
      %p42 = scmp.eq.s32.totalorder %s9, 0
      %p43 = por %p41, %p42
      %p44 = scmp.ne.s32.totalorder %s33, %s36
      %p45 = scmp.eq.s32.totalorder %s14, 3
      %p46 = por %p44, %p45
      %p47 = scmp.ne.s32.totalorder %s36, %s37
      %p48 = scmp.eq.s32.totalorder %s14, 0
      %p49 = por %p47, %p48
      %p50 = scmp.ne.s32.totalorder %s36, %s37
      %p51 = scmp.eq.s32.totalorder %s15, 3
      %p52 = por %p50, %p51
      %p54 = scmp.ne.s32.totalorder %s37, %s53
      %p55 = scmp.eq.s32.totalorder %s15, 0
      %p56 = por %p54, %p55
      %s58 = sadd.s32 %s57, 1
      %p61 = scmp.eq.s32.totalorder %s9, 3
      %p62 = scmp.ne.s32.totalorder %s57, %s59
      %p63 = scmp.eq.s32.totalorder %s9, 0
      %p64 = por %p62, %p63
      %p65 = scmp.ne.s32.totalorder %s57, %s59
      %p66 = scmp.eq.s32.totalorder %s14, 3
      %p67 = por %p65, %p66
      %p68 = scmp.ne.s32.totalorder %s59, %s60
      %p69 = scmp.eq.s32.totalorder %s14, 0
      %p70 = por %p68, %p69
      %p71 = scmp.ne.s32.totalorder %s59, %s60
      %p72 = scmp.eq.s32.totalorder %s15, 3
      %p73 = por %p71, %p72
      %p75 = scmp.ne.s32.totalorder %s60, %s74
      %p76 = scmp.eq.s32.totalorder %s15, 0
      %p77 = por %p75, %p76
      %s79 = sadd.s32 %s78, 1
      %p82 = scmp.eq.s32.totalorder %s9, 3
      %p83 = scmp.ne.s32.totalorder %s78, %s80
      %p84 = scmp.eq.s32.totalorder %s9, 0
      %p85 = por %p83, %p84
      %p86 = scmp.ne.s32.totalorder %s78, %s80
      %p87 = scmp.eq.s32.totalorder %s14, 3
      %p88 = por %p86, %p87
      %p89 = scmp.ne.s32.totalorder %s80, %s81
      %p90 = scmp.eq.s32.totalorder %s14, 0
      %p91 = por %p89, %p90
      %p92 = scmp.ne.s32.totalorder %s80, %s81
      %p93 = scmp.eq.s32.totalorder %s15, 3
      %p94 = por %p92, %p93
      %p96 = scmp.ne.s32.totalorder %s81, %s95
      %p97 = scmp.eq.s32.totalorder %s15, 0
      %p98 = por %p96, %p97
      %s99 = ssub.s32 %s16, %s28
      %s100 = ssub.s32 %s17, %s24
      %s101 = sor.u32 %s99, %s100
      %p102 = scmp.eq.s32.totalorder %s101, 0
      %s104 = sadd.s32 %s103, 1
      %s105 = scalar_select %p102, %s103, %s104
      %p108 = pneg %p102
      %p109 = scmp.eq.s32.totalorder %s9, 3
      %p110 = por %p108, %p109
      %p111 = scmp.ne.s32.totalorder %s103, %s106
      %p112 = scmp.eq.s32.totalorder %s9, 0
      %p113 = por %p111, %p112
      %p114 = scmp.ne.s32.totalorder %s103, %s106
      %p115 = scmp.eq.s32.totalorder %s14, 3
      %p116 = por %p114, %p115
      %p117 = scmp.ne.s32.totalorder %s106, %s107
      %p118 = scmp.eq.s32.totalorder %s14, 0
      %p119 = por %p117, %p118
      %p120 = scmp.ne.s32.totalorder %s106, %s107
      %p121 = scmp.eq.s32.totalorder %s15, 3
      %p122 = por %p120, %p121
      %p124 = scmp.ne.s32.totalorder %s107, %s123
      %p125 = scmp.eq.s32.totalorder %s15, 0
      %p126 = por %p124, %p125
      %p127 = scmp.le.s32.totalorder 1, %s9
      %p128 = scmp.lt.s32.totalorder %s9, 5
      %p129 = pnand %p127, %p128
      %p130 = pneg %p129
      // Predicated region
      $region9: #{gated_qdwconv.1} parent=5 // pred_check
        _
      $region10: #{gated_qdwconv.1} parent=5 // pred_check_branch
        %132 = sbr.rel (%p129) target = $region12
      $region11: #{gated_qdwconv.1} parent=5 // pred_region
        %s133 = ssub.s32 %s9, 1
        // Predicated region
        $region13: #{gated_qdwconv.1} parent=11 // pred_check
          %p134 = pneg %p70
        $region14: #{gated_qdwconv.1} parent=11 // pred_check_branch
          %136 = sbr.rel (%p134) target = $region16
        $region15: #{gated_qdwconv.1} parent=11 // pred_region
          _
        $region16: #{gated_qdwconv.1} parent=11 // pred_fallthru
          _
        // Predicated region
        $region17: #{gated_qdwconv.1} parent=11 // pred_check
          %p137 = pneg %p91
        $region18: #{gated_qdwconv.1} parent=11 // pred_check_branch
          %139 = sbr.rel (%p137) target = $region20
        $region19: #{gated_qdwconv.1} parent=11 // pred_region
          _
        $region20: #{gated_qdwconv.1} parent=11 // pred_fallthru
          _
      $region12: #{gated_qdwconv.1} parent=5 // pred_fallthru
        _
      %p140 = scmp.lt.s32.totalorder %s9, 4
      // Predicated region
      $region21: #{gated_qdwconv.1} parent=5 // pred_check
        %p141 = pneg %p140
      $region22: #{gated_qdwconv.1} parent=5 // pred_check_branch
        %143 = sbr.rel (%p141) target = $region24
      $region23: #{gated_qdwconv.1} parent=5 // pred_region
        // Predicated region
        $region25: #{gated_qdwconv.1} parent=23 // pred_check
          %p144 = pneg %p43
        $region26: #{gated_qdwconv.1} parent=23 // pred_check_branch
          %146 = sbr.rel (%p144) target = $region28
        $region27: #{gated_qdwconv.1} parent=23 // pred_region
          %p147 = scmp.lt.s32.totalorder %s16, 1
          %s148 = scalar_select %p147, %s16, 1
          %p149 = scmp.lt.s32.totalorder %s17, 1
          %s150 = scalar_select %p149, %s17, 1
          %s151 = smul.addr %s150, 4
          %s152 = smul.addr %s148, 8
          %s153 = sadd.s32 %s151, %s152
          %s154 = smul.addr %s153, 8
          %s155 = scalar_lea.vmem %s0, %s154
        $region28: #{gated_qdwconv.1} parent=23 // pred_fallthru
          _
      $region24: #{gated_qdwconv.1} parent=5 // pred_fallthru
        _
      %p156 = scmp.le.s32.totalorder 1, %s9
      %p157 = scmp.lt.s32.totalorder %s9, 5
      %p158 = pnand %p156, %p157
      %p159 = pneg %p158
      // Predicated region
      $region29: #{gated_qdwconv.1} parent=5 // pred_check
        _
      $region30: #{gated_qdwconv.1} parent=5 // pred_check_branch
        %161 = sbr.rel (%p158) target = $region32
      $region31: #{gated_qdwconv.1} parent=5 // pred_region
        %s162 = ssub.s32 %s9, 1
        %p163 = scmp.lt.s32.totalorder %s18, 1
        %s164 = scalar_select %p163, %s18, 1
        %p165 = scmp.lt.s32.totalorder %s19, 1
        %s166 = scalar_select %p165, %s19, 1
        %s167 = smul.addr %s166, 4
        %s168 = smul.addr %s164, 8
        %s169 = sadd.s32 %s167, %s168
        %s170 = smul.addr %s169, 8
        %s171 = scalar_lea.vmem %s0, %s170
        %p172 = pneg %p49
        %p173 = pneg %p46
        %p174 = pneg %p70
        %p175 = pneg %p67
        %p176 = pneg %p91
        %p177 = pneg %p88
        %p178 = pneg %p119
        %p179 = pneg %p116
        %s180 = sand.u32 %s106, 1
        %s181 = sand.u32 %s106, 1
        %s182 = smul.addr %s181, 32
        %s183 = scalar_lea.vmem [#allocation2], %s182
        %p184 = scmp.lt.s32.totalorder %s18, 1
        %s185 = scalar_select %p184, %s18, 1
        %p186 = scmp.lt.s32.totalorder %s19, 1
        %s187 = scalar_select %p186, %s19, 1
        %s188 = smul.addr %s187, 4
        %s189 = smul.addr %s185, 8
        %s190 = sadd.s32 %s188, %s189
        %s191 = smul.addr %s190, 8
        %s192 = scalar_lea.vmem %s0, %s191
        %v193 = vld [vmem:[%s192] sm:$0xff]
        %v194 = vld [vmem:[%s192 + $0x8] sm:$0xff]
        %v195 = vld [vmem:[%s192 + $0x10] sm:$0xff]
        %v196 = vld [vmem:[%s192 + $0x18] sm:$0xff]
        %v197 = vlaneseq
        %v198 = vand.u32 %v197, 127
        %v199 = vadd.s32 %v198, 128
        %vm200 = vcmp.lt.s32.totalorder %v198, 0
        %v201 = vsub.s32 0, %v198
        %v202 = vsel %vm200, %v201, %v198
        %v203 = vshrl.u32 %v202, 4
        %v204 = vand.u32 %v202, 15
        %v205 = vsub.s32 0, %v204
        %v206 = vsel %vm200, %v205, %v204
        %vm207 = vcmp.lt.s32.totalorder %v199, 0
        %v208 = vsub.s32 0, %v199
        %v209 = vsel %vm207, %v208, %v199
        %v210 = vshrl.u32 %v209, 4
        %v211 = vand.u32 %v209, 15
        %v212 = vsub.s32 0, %v211
        %v213 = vsel %vm207, %v212, %v211
        %vm214 = vcmp.ne.s32.totalorder %v206, 0
        %vm215 = vcmp.ne.s32.totalorder %v213, 0
        %vm216 = vcmp.lt.s32.totalorder %v206, 0
        %vm217 = vcmp.lt.s32.totalorder %v213, 0
        %vm218 = vmand %vm216, %vm214
        %vm219 = vmand %vm217, %vm215
        %v220 = vadd.s32 %v206, 16
        %v221 = vadd.s32 %v213, 16
        %v222 = vsel %vm218, %v220, %v206
        %v223 = vsel %vm219, %v221, %v213
        %p224 = scmp.eq.s32.totalorder %s19, 0
        %s225 = scalar_select %p224, 16, 0
        %p226 = scmp.eq.s32.totalorder %s19, 1
        %s227 = scalar_select %p226, 144, 160
        %v228 = vstv %s225
        %vm229 = vcmp.ge.s32.totalorder %v198, %v228
        %vm230 = vcmp.ge.s32.totalorder %v199, %v228
        %v231 = vstv %s227
        %vm232 = vcmp.lt.s32.totalorder %v198, %v231
        %vm233 = vcmp.lt.s32.totalorder %v199, %v231
        %vm234 = vmand %vm229, %vm232
        %vm235 = vmand %vm230, %vm233
        %vm236 = vcmp.ge.s32.totalorder %v222, 1
        %vm237 = vcmp.ge.s32.totalorder %v223, 1
        %vm238 = vcmp.le.s32.totalorder %v222, 14
        %vm239 = vcmp.le.s32.totalorder %v223, 14
        %v240 = vld [vmem:[%s1] sm:$0xff]
        %v241 = vld [vmem:[%s1 + $0x8] sm:$0xff]
        %v242 = vld [vmem:[%s1 + $0x10] sm:$0xff]
        %v243 = vld [vmem:[%s1 + $0x18] sm:$0xff]
        %245 = vset.pattern.permute.xlu0 25
        %246 = vperm.xlu0 %245, %v240
        %v247 = vpop.permute.xlu0 %246
        %250 = vset.pattern.permute.xlu0 25
        %251 = vperm.xlu0 %250, %v241
        %v252 = vpop.permute.xlu0 %251
        %255 = vset.pattern.permute.xlu0 25
        %256 = vperm.xlu0 %255, %v242
        %v257 = vpop.permute.xlu0 %256
        %260 = vset.pattern.permute.xlu0 25
        %261 = vperm.xlu0 %260, %v243
        %v262 = vpop.permute.xlu0 %261
        %vm264 = vcmask 130048
        %v265 = vsel %vm264, %v240, 0
        %v267 = vsel %vm264, %v241, 0
        %v269 = vsel %vm264, %v242, 0
        %v271 = vsel %vm264, %v243, 0
        %273 = vmatprep.subr.mxu0 %v194
        %274 = vmatpush1.msra.mxu0 %v193
        %275 = vmatprep.subr.mxu0 %v196
        %276 = vmatpush1.msra.mxu0 %v195
        %277 = vmatprep.subr.mxu0 0.0
        %278 = vmatpush1.msra.mxu0 0.0
        %279 = vmatprep.subr.mxu0 0.0
        %280 = vmatpush1.msra.mxu0 0.0
        %281 = vmatprep.subr.mxu0 0.0
        %282 = vmatpush1.msra.mxu0 0.0
        %283 = vmatprep.subr.mxu0 0.0
        %284 = vmatpush1.msra.mxu0 0.0
        %285 = vmatprep.subr.mxu0 0.0
        %286 = vmatpush1.msra.mxu0 0.0
        %287 = vmatprep.subr.mxu0 0.0
        %288 = vmatpush1.msra.mxu0 0.0
        %289 = vmatprep.subr.mxu0 0.0
        %290 = vmatpush1.msra.mxu0 0.0
        %291 = vmatprep.subr.mxu0 0.0
        %292 = vmatpush1.msra.mxu0 0.0
        %293 = vmatprep.subr.mxu0 0.0
        %294 = vmatpush1.msra.mxu0 0.0
        %295 = vmatprep.subr.mxu0 0.0
        %296 = vmatpush1.msra.mxu0 0.0
        %297 = vmatprep.subr.mxu0 0.0
        %298 = vmatpush1.msra.mxu0 0.0
        %299 = vmatprep.subr.mxu0 0.0
        %300 = vmatpush1.msra.mxu0 0.0
        %301 = vmatprep.subr.mxu0 0.0
        %302 = vmatpush1.msra.mxu0 0.0
        %303 = vmatprep.subr.mxu0 0.0
        %304 = vmatpush1.msra.mxu0 0.0
        %305 = vmatprep.subr.mxu0 0.0
        %306 = vmatpush1.msra.mxu0 0.0
        %307 = vmatprep.subr.mxu0 0.0
        %308 = vmatpush1.msra.mxu0 0.0
        %309 = vmatprep.subr.mxu0 0.0
        %310 = vmatpush1.msra.mxu0 0.0
        %311 = vmatprep.subr.mxu0 0.0
        %312 = vmatpush1.msra.mxu0 0.0
        %313 = vmatprep.subr.mxu0 0.0
        %314 = vmatpush1.msra.mxu0 0.0
        %315 = vmatprep.subr.mxu0 0.0
        %316 = vmatpush1.msra.mxu0 0.0
        %317 = vmatprep.subr.mxu0 0.0
        %318 = vmatpush1.msra.mxu0 0.0
        %319 = vmatprep.subr.mxu0 0.0
        %320 = vmatpush1.msra.mxu0 0.0
        %321 = vmatprep.subr.mxu0 0.0
        %322 = vmatpush1.msra.mxu0 0.0
        %323 = vmatprep.subr.mxu0 0.0
        %324 = vmatpush1.msra.mxu0 0.0
        %325 = vmatprep.subr.mxu0 0.0
        %326 = vmatpush1.msra.mxu0 0.0
        %327 = vmatprep.subr.mxu0 0.0
        %328 = vmatpush1.msra.mxu0 0.0
        %329 = vmatprep.subr.mxu0 0.0
        %330 = vmatpush1.msra.mxu0 0.0
        %331 = vmatprep.subr.mxu0 0.0
        %332 = vmatpush1.msra.mxu0 0.0
        %333 = vmatprep.subr.mxu0 0.0
        %334 = vmatpush1.msra.mxu0 0.0
        %335 = vmatprep.subr.mxu0 0.0
        %336 = vmatpush1.msra.mxu0 0.0
        %337 = vmatprep.mubr.f32.mxu0 0.0
        %338 = vmatmul.mubr.f32.gmra.mrb[0].mxu0 %v265
        %v339 = vpop.f32.mrb[0].mxu0
        %v340 = vadd.f32 %v247, %v339
        %v341 = vpop.f32.mrb[0].mxu0
        %v342 = vadd.f32 %v247, %v341
        %343 = vmatprep.mubr.f32.mxu0 0.0
        %344 = vmatmul.mubr.f32.gmra.mrb[0].mxu0 %v267
        %v345 = vpop.f32.mrb[0].mxu0
        %v346 = vadd.f32 %v252, %v345
        %v347 = vpop.f32.mrb[0].mxu0
        %v348 = vadd.f32 %v252, %v347
        %349 = vmatprep.mubr.f32.mxu0 0.0
        %350 = vmatmul.mubr.f32.gmra.mrb[0].mxu0 %v269
        %v351 = vpop.f32.mrb[0].mxu0
        %v352 = vadd.f32 %v257, %v351
        %v353 = vpop.f32.mrb[0].mxu0
        %v354 = vadd.f32 %v257, %v353
        %355 = vmatprep.mubr.f32.mxu0 0.0
        %356 = vmatmul.mubr.f32.gmra.mrb[0].mxu0 %v271
        %v357 = vpop.f32.mrb[0].mxu0
        %v358 = vadd.f32 %v262, %v357
        %v359 = vpop.f32.mrb[0].mxu0
        %v360 = vadd.f32 %v262, %v359
        %361 = vdwg.mxu0
        %v362 = vsel %vm234, 1, 0
        %v363 = vsel %vm235, 1, 0
        %vm364 = vcmp.eq.s32.totalorder %v362, 1
        %vm365 = vcmp.eq.s32.totalorder %v363, 1
        %v366 = vsel %vm364, %v340, 0.0
        %v367 = vsel %vm365, %v342, 0.0
        %v368 = vsel %vm364, %v346, 0.0
        %v369 = vsel %vm365, %v348, 0.0
        %v370 = vsel %vm364, %v352, 0.0
        %v371 = vsel %vm365, %v354, 0.0
        %v372 = vsel %vm364, %v358, 0.0
        %v373 = vsel %vm365, %v360, 0.0
        %374 = vrot.lane.b32.xlu0 %v366, 1
        %v375 = vpop.permute.xlu0 %374
        %376 = vrot.lane.b32.xlu0 %v368, 1
        %v377 = vpop.permute.xlu0 %376
        %378 = vrot.lane.b32.xlu0 %v370, 1
        %v379 = vpop.permute.xlu0 %378
        %380 = vrot.lane.b32.xlu0 %v372, 1
        %v381 = vpop.permute.xlu0 %380
        %382 = vrot.lane.b32.xlu0 %v367, 1
        %v383 = vpop.permute.xlu0 %382
        %384 = vrot.lane.b32.xlu0 %v369, 1
        %v385 = vpop.permute.xlu0 %384
        %386 = vrot.lane.b32.xlu0 %v371, 1
        %v387 = vpop.permute.xlu0 %386
        %388 = vrot.lane.b32.xlu0 %v373, 1
        %v389 = vpop.permute.xlu0 %388
        %vm390 = vcmp.lt.s32.totalorder %v198, 1
        %v391 = vsel %vm390, %v375, %v383
        %v392 = vsel %vm390, %v377, %v385
        %v393 = vsel %vm390, %v379, %v387
        %v394 = vsel %vm390, %v381, %v389
        %v395 = vsel %vm390, %v383, %v375
        %v396 = vsel %vm390, %v385, %v377
        %v397 = vsel %vm390, %v387, %v379
        %v398 = vsel %vm390, %v389, %v381
        %v399 = vsel %vm236, 1, 0
        %v400 = vsel %vm237, 1, 0
        %vm401 = vcmp.eq.s32.totalorder %v399, 1
        %vm402 = vcmp.eq.s32.totalorder %v400, 1
        %v403 = vsel %vm401, %v395, 0.0
        %v404 = vsel %vm402, %v391, 0.0
        %v405 = vsel %vm401, %v396, 0.0
        %v406 = vsel %vm402, %v392, 0.0
        %v407 = vsel %vm401, %v397, 0.0
        %v408 = vsel %vm402, %v393, 0.0
        %v409 = vsel %vm401, %v398, 0.0
        %v410 = vsel %vm402, %v394, 0.0
        %411 = vrot.lane.b32.xlu0 %v366, 127
        %v412 = vpop.permute.xlu0 %411
        %413 = vrot.lane.b32.xlu0 %v368, 127
        %v414 = vpop.permute.xlu0 %413
        %415 = vrot.lane.b32.xlu0 %v370, 127
        %v416 = vpop.permute.xlu0 %415
        %417 = vrot.lane.b32.xlu0 %v372, 127
        %v418 = vpop.permute.xlu0 %417
        %419 = vrot.lane.b32.xlu0 %v367, 127
        %v420 = vpop.permute.xlu0 %419
        %421 = vrot.lane.b32.xlu0 %v369, 127
        %v422 = vpop.permute.xlu0 %421
        %423 = vrot.lane.b32.xlu0 %v371, 127
        %v424 = vpop.permute.xlu0 %423
        %425 = vrot.lane.b32.xlu0 %v373, 127
        %v426 = vpop.permute.xlu0 %425
        %vm427 = vcmp.lt.s32.totalorder %v198, 127
        %v428 = vsel %vm427, %v412, %v420
        %v429 = vsel %vm427, %v414, %v422
        %v430 = vsel %vm427, %v416, %v424
        %v431 = vsel %vm427, %v418, %v426
        %v432 = vsel %vm427, %v420, %v412
        %v433 = vsel %vm427, %v422, %v414
        %v434 = vsel %vm427, %v424, %v416
        %v435 = vsel %vm427, %v426, %v418
        %v436 = vsel %vm238, 1, 0
        %v437 = vsel %vm239, 1, 0
        %vm438 = vcmp.eq.s32.totalorder %v436, 1
        %vm439 = vcmp.eq.s32.totalorder %v437, 1
        %v440 = vsel %vm438, %v428, 0.0
        %v441 = vsel %vm439, %v432, 0.0
        %v442 = vsel %vm438, %v429, 0.0
        %v443 = vsel %vm439, %v433, 0.0
        %v444 = vsel %vm438, %v430, 0.0
        %v445 = vsel %vm439, %v434, 0.0
        %v446 = vsel %vm438, %v431, 0.0
        %v447 = vsel %vm439, %v435, 0.0
        %448 = vset.pattern.permute.xlu0 16
        %449 = vperm.xlu0 %448, %v240
        %v450 = vpop.permute.xlu0 %449
        %452 = vset.pattern.permute.xlu0 16
        %453 = vperm.xlu0 %452, %v241
        %v454 = vpop.permute.xlu0 %453
        %456 = vset.pattern.permute.xlu0 16
        %457 = vperm.xlu0 %456, %v242
        %v458 = vpop.permute.xlu0 %457
        %460 = vset.pattern.permute.xlu0 16
        %461 = vperm.xlu0 %460, %v243
        %v462 = vpop.permute.xlu0 %461
        %v464 = vmul.f32 %v403, %v450
        %v465 = vmul.f32 %v405, %v454
        %v466 = vmul.f32 %v407, %v458
        %v467 = vmul.f32 %v409, %v462
        %468 = vset.pattern.permute.xlu0 17
        %469 = vperm.xlu0 %468, %v240
        %v470 = vpop.permute.xlu0 %469
        %472 = vset.pattern.permute.xlu0 17
        %473 = vperm.xlu0 %472, %v241
        %v474 = vpop.permute.xlu0 %473
        %476 = vset.pattern.permute.xlu0 17
        %477 = vperm.xlu0 %476, %v242
        %v478 = vpop.permute.xlu0 %477
        %480 = vset.pattern.permute.xlu0 17
        %481 = vperm.xlu0 %480, %v243
        %v482 = vpop.permute.xlu0 %481
        %v484 = vmul.f32 %v366, %v470
        %v485 = vmul.f32 %v368, %v474
        %v486 = vmul.f32 %v370, %v478
        %v487 = vmul.f32 %v372, %v482
        %v488 = vadd.f32 %v464, %v484
        %v489 = vadd.f32 %v465, %v485
        %v490 = vadd.f32 %v466, %v486
        %v491 = vadd.f32 %v467, %v487
        %492 = vset.pattern.permute.xlu0 18
        %493 = vperm.xlu0 %492, %v240
        %v494 = vpop.permute.xlu0 %493
        %496 = vset.pattern.permute.xlu0 18
        %497 = vperm.xlu0 %496, %v241
        %v498 = vpop.permute.xlu0 %497
        %500 = vset.pattern.permute.xlu0 18
        %501 = vperm.xlu0 %500, %v242
        %v502 = vpop.permute.xlu0 %501
        %504 = vset.pattern.permute.xlu0 18
        %505 = vperm.xlu0 %504, %v243
        %v506 = vpop.permute.xlu0 %505
        %v508 = vmul.f32 %v440, %v494
        %v509 = vmul.f32 %v442, %v498
        %v510 = vmul.f32 %v444, %v502
        %v511 = vmul.f32 %v446, %v506
        %v512 = vadd.f32 %v488, %v508
        %v513 = vadd.f32 %v489, %v509
        %v514 = vadd.f32 %v490, %v510
        %v515 = vadd.f32 %v491, %v511
        %516 = vrot.lane.b32.xlu0 %v403, 112
        %v517 = vpop.permute.xlu0 %516
        %518 = vrot.lane.b32.xlu0 %v405, 112
        %v519 = vpop.permute.xlu0 %518
        %520 = vrot.lane.b32.xlu0 %v407, 112
        %v521 = vpop.permute.xlu0 %520
        %522 = vrot.lane.b32.xlu0 %v409, 112
        %v523 = vpop.permute.xlu0 %522
        %524 = vrot.lane.b32.xlu0 %v404, 112
        %v525 = vpop.permute.xlu0 %524
        %526 = vrot.lane.b32.xlu0 %v406, 112
        %v527 = vpop.permute.xlu0 %526
        %528 = vrot.lane.b32.xlu0 %v408, 112
        %v529 = vpop.permute.xlu0 %528
        %530 = vrot.lane.b32.xlu0 %v410, 112
        %v531 = vpop.permute.xlu0 %530
        %vm532 = vcmp.lt.s32.totalorder %v198, 112
        %v533 = vsel %vm532, %v517, %v525
        %v534 = vsel %vm532, %v519, %v527
        %v535 = vsel %vm532, %v521, %v529
        %v536 = vsel %vm532, %v523, %v531
        %537 = vset.pattern.permute.xlu0 19
        %538 = vperm.xlu0 %537, %v240
        %v539 = vpop.permute.xlu0 %538
        %541 = vset.pattern.permute.xlu0 19
        %542 = vperm.xlu0 %541, %v241
        %v543 = vpop.permute.xlu0 %542
        %545 = vset.pattern.permute.xlu0 19
        %546 = vperm.xlu0 %545, %v242
        %v547 = vpop.permute.xlu0 %546
        %549 = vset.pattern.permute.xlu0 19
        %550 = vperm.xlu0 %549, %v243
        %v551 = vpop.permute.xlu0 %550
        %v553 = vmul.f32 %v533, %v539
        %v554 = vmul.f32 %v534, %v543
        %v555 = vmul.f32 %v535, %v547
        %v556 = vmul.f32 %v536, %v551
        %v557 = vadd.f32 %v512, %v553
        %v558 = vadd.f32 %v513, %v554
        %v559 = vadd.f32 %v514, %v555
        %v560 = vadd.f32 %v515, %v556
        %561 = vrot.lane.b32.xlu0 %v366, 112
        %v562 = vpop.permute.xlu0 %561
        %563 = vrot.lane.b32.xlu0 %v368, 112
        %v564 = vpop.permute.xlu0 %563
        %565 = vrot.lane.b32.xlu0 %v370, 112
        %v566 = vpop.permute.xlu0 %565
        %567 = vrot.lane.b32.xlu0 %v372, 112
        %v568 = vpop.permute.xlu0 %567
        %569 = vrot.lane.b32.xlu0 %v367, 112
        %v570 = vpop.permute.xlu0 %569
        %571 = vrot.lane.b32.xlu0 %v369, 112
        %v572 = vpop.permute.xlu0 %571
        %573 = vrot.lane.b32.xlu0 %v371, 112
        %v574 = vpop.permute.xlu0 %573
        %575 = vrot.lane.b32.xlu0 %v373, 112
        %v576 = vpop.permute.xlu0 %575
        %v577 = vsel %vm532, %v562, %v570
        %v578 = vsel %vm532, %v564, %v572
        %v579 = vsel %vm532, %v566, %v574
        %v580 = vsel %vm532, %v568, %v576
        %581 = vset.pattern.permute.xlu0 20
        %582 = vperm.xlu0 %581, %v240
        %v583 = vpop.permute.xlu0 %582
        %585 = vset.pattern.permute.xlu0 20
        %586 = vperm.xlu0 %585, %v241
        %v587 = vpop.permute.xlu0 %586
        %589 = vset.pattern.permute.xlu0 20
        %590 = vperm.xlu0 %589, %v242
        %v591 = vpop.permute.xlu0 %590
        %593 = vset.pattern.permute.xlu0 20
        %594 = vperm.xlu0 %593, %v243
        %v595 = vpop.permute.xlu0 %594
        %v597 = vmul.f32 %v577, %v583
        %v598 = vmul.f32 %v578, %v587
        %v599 = vmul.f32 %v579, %v591
        %v600 = vmul.f32 %v580, %v595
        %v601 = vadd.f32 %v557, %v597
        %v602 = vadd.f32 %v558, %v598
        %v603 = vadd.f32 %v559, %v599
        %v604 = vadd.f32 %v560, %v600
        %605 = vrot.lane.b32.xlu0 %v440, 112
        %v606 = vpop.permute.xlu0 %605
        %607 = vrot.lane.b32.xlu0 %v442, 112
        %v608 = vpop.permute.xlu0 %607
        %609 = vrot.lane.b32.xlu0 %v444, 112
        %v610 = vpop.permute.xlu0 %609
        %611 = vrot.lane.b32.xlu0 %v446, 112
        %v612 = vpop.permute.xlu0 %611
        %613 = vrot.lane.b32.xlu0 %v441, 112
        %v614 = vpop.permute.xlu0 %613
        %615 = vrot.lane.b32.xlu0 %v443, 112
        %v616 = vpop.permute.xlu0 %615
        %617 = vrot.lane.b32.xlu0 %v445, 112
        %v618 = vpop.permute.xlu0 %617
        %619 = vrot.lane.b32.xlu0 %v447, 112
        %v620 = vpop.permute.xlu0 %619
        %v621 = vsel %vm532, %v606, %v614
        %v622 = vsel %vm532, %v608, %v616
        %v623 = vsel %vm532, %v610, %v618
        %v624 = vsel %vm532, %v612, %v620
        %625 = vset.pattern.permute.xlu0 21
        %626 = vperm.xlu0 %625, %v240
        %v627 = vpop.permute.xlu0 %626
        %629 = vset.pattern.permute.xlu0 21
        %630 = vperm.xlu0 %629, %v241
        %v631 = vpop.permute.xlu0 %630
        %633 = vset.pattern.permute.xlu0 21
        %634 = vperm.xlu0 %633, %v242
        %v635 = vpop.permute.xlu0 %634
        %637 = vset.pattern.permute.xlu0 21
        %638 = vperm.xlu0 %637, %v243
        %v639 = vpop.permute.xlu0 %638
        %v641 = vmul.f32 %v621, %v627
        %v642 = vmul.f32 %v622, %v631
        %v643 = vmul.f32 %v623, %v635
        %v644 = vmul.f32 %v624, %v639
        %v645 = vadd.f32 %v601, %v641
        %v646 = vadd.f32 %v602, %v642
        %v647 = vadd.f32 %v603, %v643
        %v648 = vadd.f32 %v604, %v644
        %649 = vrot.lane.b32.xlu0 %v403, 96
        %v650 = vpop.permute.xlu0 %649
        %651 = vrot.lane.b32.xlu0 %v405, 96
        %v652 = vpop.permute.xlu0 %651
        %653 = vrot.lane.b32.xlu0 %v407, 96
        %v654 = vpop.permute.xlu0 %653
        %655 = vrot.lane.b32.xlu0 %v409, 96
        %v656 = vpop.permute.xlu0 %655
        %657 = vrot.lane.b32.xlu0 %v404, 96
        %v658 = vpop.permute.xlu0 %657
        %659 = vrot.lane.b32.xlu0 %v406, 96
        %v660 = vpop.permute.xlu0 %659
        %661 = vrot.lane.b32.xlu0 %v408, 96
        %v662 = vpop.permute.xlu0 %661
        %663 = vrot.lane.b32.xlu0 %v410, 96
        %v664 = vpop.permute.xlu0 %663
        %vm665 = vcmp.lt.s32.totalorder %v198, 96
        %v666 = vsel %vm665, %v650, %v658
        %v667 = vsel %vm665, %v652, %v660
        %v668 = vsel %vm665, %v654, %v662
        %v669 = vsel %vm665, %v656, %v664
        %670 = vset.pattern.permute.xlu0 22
        %671 = vperm.xlu0 %670, %v240
        %v672 = vpop.permute.xlu0 %671
        %674 = vset.pattern.permute.xlu0 22
        %675 = vperm.xlu0 %674, %v241
        %v676 = vpop.permute.xlu0 %675
        %678 = vset.pattern.permute.xlu0 22
        %679 = vperm.xlu0 %678, %v242
        %v680 = vpop.permute.xlu0 %679
        %682 = vset.pattern.permute.xlu0 22
        %683 = vperm.xlu0 %682, %v243
        %v684 = vpop.permute.xlu0 %683
        %v686 = vmul.f32 %v666, %v672
        %v687 = vmul.f32 %v667, %v676
        %v688 = vmul.f32 %v668, %v680
        %v689 = vmul.f32 %v669, %v684
        %v690 = vadd.f32 %v645, %v686
        %v691 = vadd.f32 %v646, %v687
        %v692 = vadd.f32 %v647, %v688
        %v693 = vadd.f32 %v648, %v689
        %694 = vrot.lane.b32.xlu0 %v366, 96
        %v695 = vpop.permute.xlu0 %694
        %696 = vrot.lane.b32.xlu0 %v368, 96
        %v697 = vpop.permute.xlu0 %696
        %698 = vrot.lane.b32.xlu0 %v370, 96
        %v699 = vpop.permute.xlu0 %698
        %700 = vrot.lane.b32.xlu0 %v372, 96
        %v701 = vpop.permute.xlu0 %700
        %702 = vrot.lane.b32.xlu0 %v367, 96
        %v703 = vpop.permute.xlu0 %702
        %704 = vrot.lane.b32.xlu0 %v369, 96
        %v705 = vpop.permute.xlu0 %704
        %706 = vrot.lane.b32.xlu0 %v371, 96
        %v707 = vpop.permute.xlu0 %706
        %708 = vrot.lane.b32.xlu0 %v373, 96
        %v709 = vpop.permute.xlu0 %708
        %v710 = vsel %vm665, %v695, %v703
        %v711 = vsel %vm665, %v697, %v705
        %v712 = vsel %vm665, %v699, %v707
        %v713 = vsel %vm665, %v701, %v709
        %714 = vset.pattern.permute.xlu0 23
        %715 = vperm.xlu0 %714, %v240
        %v716 = vpop.permute.xlu0 %715
        %718 = vset.pattern.permute.xlu0 23
        %719 = vperm.xlu0 %718, %v241
        %v720 = vpop.permute.xlu0 %719
        %722 = vset.pattern.permute.xlu0 23
        %723 = vperm.xlu0 %722, %v242
        %v724 = vpop.permute.xlu0 %723
        %726 = vset.pattern.permute.xlu0 23
        %727 = vperm.xlu0 %726, %v243
        %v728 = vpop.permute.xlu0 %727
        %v730 = vmul.f32 %v710, %v716
        %v731 = vmul.f32 %v711, %v720
        %v732 = vmul.f32 %v712, %v724
        %v733 = vmul.f32 %v713, %v728
        %v734 = vadd.f32 %v690, %v730
        %v735 = vadd.f32 %v691, %v731
        %v736 = vadd.f32 %v692, %v732
        %v737 = vadd.f32 %v693, %v733
        %738 = vrot.lane.b32.xlu0 %v440, 96
        %v739 = vpop.permute.xlu0 %738
        %740 = vrot.lane.b32.xlu0 %v442, 96
        %v741 = vpop.permute.xlu0 %740
        %742 = vrot.lane.b32.xlu0 %v444, 96
        %v743 = vpop.permute.xlu0 %742
        %744 = vrot.lane.b32.xlu0 %v446, 96
        %v745 = vpop.permute.xlu0 %744
        %746 = vrot.lane.b32.xlu0 %v441, 96
        %v747 = vpop.permute.xlu0 %746
        %748 = vrot.lane.b32.xlu0 %v443, 96
        %v749 = vpop.permute.xlu0 %748
        %750 = vrot.lane.b32.xlu0 %v445, 96
        %v751 = vpop.permute.xlu0 %750
        %752 = vrot.lane.b32.xlu0 %v447, 96
        %v753 = vpop.permute.xlu0 %752
        %v754 = vsel %vm665, %v739, %v747
        %v755 = vsel %vm665, %v741, %v749
        %v756 = vsel %vm665, %v743, %v751
        %v757 = vsel %vm665, %v745, %v753
        %758 = vset.pattern.permute.xlu0 24
        %759 = vperm.xlu0 %758, %v240
        %v760 = vpop.permute.xlu0 %759
        %762 = vset.pattern.permute.xlu0 24
        %763 = vperm.xlu0 %762, %v241
        %v764 = vpop.permute.xlu0 %763
        %766 = vset.pattern.permute.xlu0 24
        %767 = vperm.xlu0 %766, %v242
        %v768 = vpop.permute.xlu0 %767
        %770 = vset.pattern.permute.xlu0 24
        %771 = vperm.xlu0 %770, %v243
        %v772 = vpop.permute.xlu0 %771
        %v774 = vmul.f32 %v754, %v760
        %v775 = vmul.f32 %v755, %v764
        %v776 = vmul.f32 %v756, %v768
        %v777 = vmul.f32 %v757, %v772
        %v778 = vadd.f32 %v734, %v774
        %v779 = vadd.f32 %v735, %v775
        %v780 = vadd.f32 %v736, %v776
        %v781 = vadd.f32 %v737, %v777
        %782 = vset.pattern.permute.xlu0 26
        %783 = vperm.xlu0 %782, %v240
        %v784 = vpop.permute.xlu0 %783
        %786 = vset.pattern.permute.xlu0 26
        %787 = vperm.xlu0 %786, %v241
        %v788 = vpop.permute.xlu0 %787
        %790 = vset.pattern.permute.xlu0 26
        %791 = vperm.xlu0 %790, %v242
        %v792 = vpop.permute.xlu0 %791
        %794 = vset.pattern.permute.xlu0 26
        %795 = vperm.xlu0 %794, %v243
        %v796 = vpop.permute.xlu0 %795
        %v798 = vadd.f32 %v778, %v784
        %v799 = vadd.f32 %v779, %v788
        %v800 = vadd.f32 %v780, %v792
        %v801 = vadd.f32 %v781, %v796
        %v802 = vld [vmem:[%s2] sm:$0xff]
        %v803 = vld [vmem:[%s2 + $0x8] sm:$0xff]
        %v804 = vld [vmem:[%s2 + $0x10] sm:$0xff]
        %v805 = vld [vmem:[%s2 + $0x18] sm:$0xff]
        %807 = vset.pattern.permute.xlu0 25
        %808 = vperm.xlu0 %807, %v802
        %v809 = vpop.permute.xlu0 %808
        %812 = vset.pattern.permute.xlu0 25
        %813 = vperm.xlu0 %812, %v803
        %v814 = vpop.permute.xlu0 %813
        %817 = vset.pattern.permute.xlu0 25
        %818 = vperm.xlu0 %817, %v804
        %v819 = vpop.permute.xlu0 %818
        %822 = vset.pattern.permute.xlu0 25
        %823 = vperm.xlu0 %822, %v805
        %v824 = vpop.permute.xlu0 %823
        %v826 = vsel %vm264, %v802, 0
        %v828 = vsel %vm264, %v803, 0
        %v830 = vsel %vm264, %v804, 0
        %v832 = vsel %vm264, %v805, 0
        %834 = vmatprep.subr.mxu0 %v194
        %835 = vmatpush1.msra.mxu0 %v193
        %836 = vmatprep.subr.mxu0 %v196
        %837 = vmatpush1.msra.mxu0 %v195
        %838 = vmatprep.subr.mxu0 0.0
        %839 = vmatpush1.msra.mxu0 0.0
        %840 = vmatprep.subr.mxu0 0.0
        %841 = vmatpush1.msra.mxu0 0.0
        %842 = vmatprep.subr.mxu0 0.0
        %843 = vmatpush1.msra.mxu0 0.0
        %844 = vmatprep.subr.mxu0 0.0
        %845 = vmatpush1.msra.mxu0 0.0
        %846 = vmatprep.subr.mxu0 0.0
        %847 = vmatpush1.msra.mxu0 0.0
        %848 = vmatprep.subr.mxu0 0.0
        %849 = vmatpush1.msra.mxu0 0.0
        %850 = vmatprep.subr.mxu0 0.0
        %851 = vmatpush1.msra.mxu0 0.0
        %852 = vmatprep.subr.mxu0 0.0
        %853 = vmatpush1.msra.mxu0 0.0
        %854 = vmatprep.subr.mxu0 0.0
        %855 = vmatpush1.msra.mxu0 0.0
        %856 = vmatprep.subr.mxu0 0.0
        %857 = vmatpush1.msra.mxu0 0.0
        %858 = vmatprep.subr.mxu0 0.0
        %859 = vmatpush1.msra.mxu0 0.0
        %860 = vmatprep.subr.mxu0 0.0
        %861 = vmatpush1.msra.mxu0 0.0
        %862 = vmatprep.subr.mxu0 0.0
        %863 = vmatpush1.msra.mxu0 0.0
        %864 = vmatprep.subr.mxu0 0.0
        %865 = vmatpush1.msra.mxu0 0.0
        %866 = vmatprep.subr.mxu0 0.0
        %867 = vmatpush1.msra.mxu0 0.0
        %868 = vmatprep.subr.mxu0 0.0
        %869 = vmatpush1.msra.mxu0 0.0
        %870 = vmatprep.subr.mxu0 0.0
        %871 = vmatpush1.msra.mxu0 0.0
        %872 = vmatprep.subr.mxu0 0.0
        %873 = vmatpush1.msra.mxu0 0.0
        %874 = vmatprep.subr.mxu0 0.0
        %875 = vmatpush1.msra.mxu0 0.0
        %876 = vmatprep.subr.mxu0 0.0
        %877 = vmatpush1.msra.mxu0 0.0
        %878 = vmatprep.subr.mxu0 0.0
        %879 = vmatpush1.msra.mxu0 0.0
        %880 = vmatprep.subr.mxu0 0.0
        %881 = vmatpush1.msra.mxu0 0.0
        %882 = vmatprep.subr.mxu0 0.0
        %883 = vmatpush1.msra.mxu0 0.0
        %884 = vmatprep.subr.mxu0 0.0
        %885 = vmatpush1.msra.mxu0 0.0
        %886 = vmatprep.subr.mxu0 0.0
        %887 = vmatpush1.msra.mxu0 0.0
        %888 = vmatprep.subr.mxu0 0.0
        %889 = vmatpush1.msra.mxu0 0.0
        %890 = vmatprep.subr.mxu0 0.0
        %891 = vmatpush1.msra.mxu0 0.0
        %892 = vmatprep.subr.mxu0 0.0
        %893 = vmatpush1.msra.mxu0 0.0
        %894 = vmatprep.subr.mxu0 0.0
        %895 = vmatpush1.msra.mxu0 0.0
        %896 = vmatprep.subr.mxu0 0.0
        %897 = vmatpush1.msra.mxu0 0.0
        %898 = vmatprep.mubr.f32.mxu0 0.0
        %899 = vmatmul.mubr.f32.gmra.mrb[0].mxu0 %v826
        %v900 = vpop.f32.mrb[0].mxu0
        %v901 = vadd.f32 %v809, %v900
        %v902 = vpop.f32.mrb[0].mxu0
        %v903 = vadd.f32 %v809, %v902
        %904 = vmatprep.mubr.f32.mxu0 0.0
        %905 = vmatmul.mubr.f32.gmra.mrb[0].mxu0 %v828
        %v906 = vpop.f32.mrb[0].mxu0
        %v907 = vadd.f32 %v814, %v906
        %v908 = vpop.f32.mrb[0].mxu0
        %v909 = vadd.f32 %v814, %v908
        %910 = vmatprep.mubr.f32.mxu0 0.0
        %911 = vmatmul.mubr.f32.gmra.mrb[0].mxu0 %v830
        %v912 = vpop.f32.mrb[0].mxu0
        %v913 = vadd.f32 %v819, %v912
        %v914 = vpop.f32.mrb[0].mxu0
        %v915 = vadd.f32 %v819, %v914
        %916 = vmatprep.mubr.f32.mxu0 0.0
        %917 = vmatmul.mubr.f32.gmra.mrb[0].mxu0 %v832
        %v918 = vpop.f32.mrb[0].mxu0
        %v919 = vadd.f32 %v824, %v918
        %v920 = vpop.f32.mrb[0].mxu0
        %v921 = vadd.f32 %v824, %v920
        %922 = vdwg.mxu0
        %v923 = vsel %vm364, %v901, 0.0
        %v924 = vsel %vm365, %v903, 0.0
        %v925 = vsel %vm364, %v907, 0.0
        %v926 = vsel %vm365, %v909, 0.0
        %v927 = vsel %vm364, %v913, 0.0
        %v928 = vsel %vm365, %v915, 0.0
        %v929 = vsel %vm364, %v919, 0.0
        %v930 = vsel %vm365, %v921, 0.0
        %931 = vrot.lane.b32.xlu0 %v923, 1
        %v932 = vpop.permute.xlu0 %931
        %933 = vrot.lane.b32.xlu0 %v925, 1
        %v934 = vpop.permute.xlu0 %933
        %935 = vrot.lane.b32.xlu0 %v927, 1
        %v936 = vpop.permute.xlu0 %935
        %937 = vrot.lane.b32.xlu0 %v929, 1
        %v938 = vpop.permute.xlu0 %937
        %939 = vrot.lane.b32.xlu0 %v924, 1
        %v940 = vpop.permute.xlu0 %939
        %941 = vrot.lane.b32.xlu0 %v926, 1
        %v942 = vpop.permute.xlu0 %941
        %943 = vrot.lane.b32.xlu0 %v928, 1
        %v944 = vpop.permute.xlu0 %943
        %945 = vrot.lane.b32.xlu0 %v930, 1
        %v946 = vpop.permute.xlu0 %945
        %v947 = vsel %vm390, %v932, %v940
        %v948 = vsel %vm390, %v934, %v942
        %v949 = vsel %vm390, %v936, %v944
        %v950 = vsel %vm390, %v938, %v946
        %v951 = vsel %vm390, %v940, %v932
        %v952 = vsel %vm390, %v942, %v934
        %v953 = vsel %vm390, %v944, %v936
        %v954 = vsel %vm390, %v946, %v938
        %v955 = vsel %vm401, %v951, 0.0
        %v956 = vsel %vm402, %v947, 0.0
        %v957 = vsel %vm401, %v952, 0.0
        %v958 = vsel %vm402, %v948, 0.0
        %v959 = vsel %vm401, %v953, 0.0
        %v960 = vsel %vm402, %v949, 0.0
        %v961 = vsel %vm401, %v954, 0.0
        %v962 = vsel %vm402, %v950, 0.0
        %963 = vrot.lane.b32.xlu0 %v923, 127
        %v964 = vpop.permute.xlu0 %963
        %965 = vrot.lane.b32.xlu0 %v925, 127
        %v966 = vpop.permute.xlu0 %965
        %967 = vrot.lane.b32.xlu0 %v927, 127
        %v968 = vpop.permute.xlu0 %967
        %969 = vrot.lane.b32.xlu0 %v929, 127
        %v970 = vpop.permute.xlu0 %969
        %971 = vrot.lane.b32.xlu0 %v924, 127
        %v972 = vpop.permute.xlu0 %971
        %973 = vrot.lane.b32.xlu0 %v926, 127
        %v974 = vpop.permute.xlu0 %973
        %975 = vrot.lane.b32.xlu0 %v928, 127
        %v976 = vpop.permute.xlu0 %975
        %977 = vrot.lane.b32.xlu0 %v930, 127
        %v978 = vpop.permute.xlu0 %977
        %v979 = vsel %vm427, %v964, %v972
        %v980 = vsel %vm427, %v966, %v974
        %v981 = vsel %vm427, %v968, %v976
        %v982 = vsel %vm427, %v970, %v978
        %v983 = vsel %vm427, %v972, %v964
        %v984 = vsel %vm427, %v974, %v966
        %v985 = vsel %vm427, %v976, %v968
        %v986 = vsel %vm427, %v978, %v970
        %v987 = vsel %vm438, %v979, 0.0
        %v988 = vsel %vm439, %v983, 0.0
        %v989 = vsel %vm438, %v980, 0.0
        %v990 = vsel %vm439, %v984, 0.0
        %v991 = vsel %vm438, %v981, 0.0
        %v992 = vsel %vm439, %v985, 0.0
        %v993 = vsel %vm438, %v982, 0.0
        %v994 = vsel %vm439, %v986, 0.0
        %995 = vset.pattern.permute.xlu0 16
        %996 = vperm.xlu0 %995, %v802
        %v997 = vpop.permute.xlu0 %996
        %999 = vset.pattern.permute.xlu0 16
        %1000 = vperm.xlu0 %999, %v803
        %v1001 = vpop.permute.xlu0 %1000
        %1003 = vset.pattern.permute.xlu0 16
        %1004 = vperm.xlu0 %1003, %v804
        %v1005 = vpop.permute.xlu0 %1004
        %1007 = vset.pattern.permute.xlu0 16
        %1008 = vperm.xlu0 %1007, %v805
        %v1009 = vpop.permute.xlu0 %1008
        %v1011 = vmul.f32 %v955, %v997
        %v1012 = vmul.f32 %v957, %v1001
        %v1013 = vmul.f32 %v959, %v1005
        %v1014 = vmul.f32 %v961, %v1009
        %1015 = vset.pattern.permute.xlu0 17
        %1016 = vperm.xlu0 %1015, %v802
        %v1017 = vpop.permute.xlu0 %1016
        %1019 = vset.pattern.permute.xlu0 17
        %1020 = vperm.xlu0 %1019, %v803
        %v1021 = vpop.permute.xlu0 %1020
        %1023 = vset.pattern.permute.xlu0 17
        %1024 = vperm.xlu0 %1023, %v804
        %v1025 = vpop.permute.xlu0 %1024
        %1027 = vset.pattern.permute.xlu0 17
        %1028 = vperm.xlu0 %1027, %v805
        %v1029 = vpop.permute.xlu0 %1028
        %v1031 = vmul.f32 %v923, %v1017
        %v1032 = vmul.f32 %v925, %v1021
        %v1033 = vmul.f32 %v927, %v1025
        %v1034 = vmul.f32 %v929, %v1029
        %v1035 = vadd.f32 %v1011, %v1031
        %v1036 = vadd.f32 %v1012, %v1032
        %v1037 = vadd.f32 %v1013, %v1033
        %v1038 = vadd.f32 %v1014, %v1034
        %1039 = vset.pattern.permute.xlu0 18
        %1040 = vperm.xlu0 %1039, %v802
        %v1041 = vpop.permute.xlu0 %1040
        %1043 = vset.pattern.permute.xlu0 18
        %1044 = vperm.xlu0 %1043, %v803
        %v1045 = vpop.permute.xlu0 %1044
        %1047 = vset.pattern.permute.xlu0 18
        %1048 = vperm.xlu0 %1047, %v804
        %v1049 = vpop.permute.xlu0 %1048
        %1051 = vset.pattern.permute.xlu0 18
        %1052 = vperm.xlu0 %1051, %v805
        %v1053 = vpop.permute.xlu0 %1052
        %v1055 = vmul.f32 %v987, %v1041
        %v1056 = vmul.f32 %v989, %v1045
        %v1057 = vmul.f32 %v991, %v1049
        %v1058 = vmul.f32 %v993, %v1053
        %v1059 = vadd.f32 %v1035, %v1055
        %v1060 = vadd.f32 %v1036, %v1056
        %v1061 = vadd.f32 %v1037, %v1057
        %v1062 = vadd.f32 %v1038, %v1058
        %1063 = vrot.lane.b32.xlu0 %v955, 112
        %v1064 = vpop.permute.xlu0 %1063
        %1065 = vrot.lane.b32.xlu0 %v957, 112
        %v1066 = vpop.permute.xlu0 %1065
        %1067 = vrot.lane.b32.xlu0 %v959, 112
        %v1068 = vpop.permute.xlu0 %1067
        %1069 = vrot.lane.b32.xlu0 %v961, 112
        %v1070 = vpop.permute.xlu0 %1069
        %1071 = vrot.lane.b32.xlu0 %v956, 112
        %v1072 = vpop.permute.xlu0 %1071
        %1073 = vrot.lane.b32.xlu0 %v958, 112
        %v1074 = vpop.permute.xlu0 %1073
        %1075 = vrot.lane.b32.xlu0 %v960, 112
        %v1076 = vpop.permute.xlu0 %1075
        %1077 = vrot.lane.b32.xlu0 %v962, 112
        %v1078 = vpop.permute.xlu0 %1077
        %v1079 = vsel %vm532, %v1064, %v1072
        %v1080 = vsel %vm532, %v1066, %v1074
        %v1081 = vsel %vm532, %v1068, %v1076
        %v1082 = vsel %vm532, %v1070, %v1078
        %1083 = vset.pattern.permute.xlu0 19
        %1084 = vperm.xlu0 %1083, %v802
        %v1085 = vpop.permute.xlu0 %1084
        %1087 = vset.pattern.permute.xlu0 19
        %1088 = vperm.xlu0 %1087, %v803
        %v1089 = vpop.permute.xlu0 %1088
        %1091 = vset.pattern.permute.xlu0 19
        %1092 = vperm.xlu0 %1091, %v804
        %v1093 = vpop.permute.xlu0 %1092
        %1095 = vset.pattern.permute.xlu0 19
        %1096 = vperm.xlu0 %1095, %v805
        %v1097 = vpop.permute.xlu0 %1096
        %v1099 = vmul.f32 %v1079, %v1085
        %v1100 = vmul.f32 %v1080, %v1089
        %v1101 = vmul.f32 %v1081, %v1093
        %v1102 = vmul.f32 %v1082, %v1097
        %v1103 = vadd.f32 %v1059, %v1099
        %v1104 = vadd.f32 %v1060, %v1100
        %v1105 = vadd.f32 %v1061, %v1101
        %v1106 = vadd.f32 %v1062, %v1102
        %1107 = vrot.lane.b32.xlu0 %v923, 112
        %v1108 = vpop.permute.xlu0 %1107
        %1109 = vrot.lane.b32.xlu0 %v925, 112
        %v1110 = vpop.permute.xlu0 %1109
        %1111 = vrot.lane.b32.xlu0 %v927, 112
        %v1112 = vpop.permute.xlu0 %1111
        %1113 = vrot.lane.b32.xlu0 %v929, 112
        %v1114 = vpop.permute.xlu0 %1113
        %1115 = vrot.lane.b32.xlu0 %v924, 112
        %v1116 = vpop.permute.xlu0 %1115
        %1117 = vrot.lane.b32.xlu0 %v926, 112
        %v1118 = vpop.permute.xlu0 %1117
        %1119 = vrot.lane.b32.xlu0 %v928, 112
        %v1120 = vpop.permute.xlu0 %1119
        %1121 = vrot.lane.b32.xlu0 %v930, 112
        %v1122 = vpop.permute.xlu0 %1121
        %v1123 = vsel %vm532, %v1108, %v1116
        %v1124 = vsel %vm532, %v1110, %v1118
        %v1125 = vsel %vm532, %v1112, %v1120
        %v1126 = vsel %vm532, %v1114, %v1122
        %1127 = vset.pattern.permute.xlu0 20
        %1128 = vperm.xlu0 %1127, %v802
        %v1129 = vpop.permute.xlu0 %1128
        %1131 = vset.pattern.permute.xlu0 20
        %1132 = vperm.xlu0 %1131, %v803
        %v1133 = vpop.permute.xlu0 %1132
        %1135 = vset.pattern.permute.xlu0 20
        %1136 = vperm.xlu0 %1135, %v804
        %v1137 = vpop.permute.xlu0 %1136
        %1139 = vset.pattern.permute.xlu0 20
        %1140 = vperm.xlu0 %1139, %v805
        %v1141 = vpop.permute.xlu0 %1140
        %v1143 = vmul.f32 %v1123, %v1129
        %v1144 = vmul.f32 %v1124, %v1133
        %v1145 = vmul.f32 %v1125, %v1137
        %v1146 = vmul.f32 %v1126, %v1141
        %v1147 = vadd.f32 %v1103, %v1143
        %v1148 = vadd.f32 %v1104, %v1144
        %v1149 = vadd.f32 %v1105, %v1145
        %v1150 = vadd.f32 %v1106, %v1146
        %1151 = vrot.lane.b32.xlu0 %v987, 112
        %v1152 = vpop.permute.xlu0 %1151
        %1153 = vrot.lane.b32.xlu0 %v989, 112
        %v1154 = vpop.permute.xlu0 %1153
        %1155 = vrot.lane.b32.xlu0 %v991, 112
        %v1156 = vpop.permute.xlu0 %1155
        %1157 = vrot.lane.b32.xlu0 %v993, 112
        %v1158 = vpop.permute.xlu0 %1157
        %1159 = vrot.lane.b32.xlu0 %v988, 112
        %v1160 = vpop.permute.xlu0 %1159
        %1161 = vrot.lane.b32.xlu0 %v990, 112
        %v1162 = vpop.permute.xlu0 %1161
        %1163 = vrot.lane.b32.xlu0 %v992, 112
        %v1164 = vpop.permute.xlu0 %1163
        %1165 = vrot.lane.b32.xlu0 %v994, 112
        %v1166 = vpop.permute.xlu0 %1165
        %v1167 = vsel %vm532, %v1152, %v1160
        %v1168 = vsel %vm532, %v1154, %v1162
        %v1169 = vsel %vm532, %v1156, %v1164
        %v1170 = vsel %vm532, %v1158, %v1166
        %1171 = vset.pattern.permute.xlu0 21
        %1172 = vperm.xlu0 %1171, %v802
        %v1173 = vpop.permute.xlu0 %1172
        %1175 = vset.pattern.permute.xlu0 21
        %1176 = vperm.xlu0 %1175, %v803
        %v1177 = vpop.permute.xlu0 %1176
        %1179 = vset.pattern.permute.xlu0 21
        %1180 = vperm.xlu0 %1179, %v804
        %v1181 = vpop.permute.xlu0 %1180
        %1183 = vset.pattern.permute.xlu0 21
        %1184 = vperm.xlu0 %1183, %v805
        %v1185 = vpop.permute.xlu0 %1184
        %v1187 = vmul.f32 %v1167, %v1173
        %v1188 = vmul.f32 %v1168, %v1177
        %v1189 = vmul.f32 %v1169, %v1181
        %v1190 = vmul.f32 %v1170, %v1185
        %v1191 = vadd.f32 %v1147, %v1187
        %v1192 = vadd.f32 %v1148, %v1188
        %v1193 = vadd.f32 %v1149, %v1189
        %v1194 = vadd.f32 %v1150, %v1190
        %1195 = vrot.lane.b32.xlu0 %v955, 96
        %v1196 = vpop.permute.xlu0 %1195
        %1197 = vrot.lane.b32.xlu0 %v957, 96
        %v1198 = vpop.permute.xlu0 %1197
        %1199 = vrot.lane.b32.xlu0 %v959, 96
        %v1200 = vpop.permute.xlu0 %1199
        %1201 = vrot.lane.b32.xlu0 %v961, 96
        %v1202 = vpop.permute.xlu0 %1201
        %1203 = vrot.lane.b32.xlu0 %v956, 96
        %v1204 = vpop.permute.xlu0 %1203
        %1205 = vrot.lane.b32.xlu0 %v958, 96
        %v1206 = vpop.permute.xlu0 %1205
        %1207 = vrot.lane.b32.xlu0 %v960, 96
        %v1208 = vpop.permute.xlu0 %1207
        %1209 = vrot.lane.b32.xlu0 %v962, 96
        %v1210 = vpop.permute.xlu0 %1209
        %v1211 = vsel %vm665, %v1196, %v1204
        %v1212 = vsel %vm665, %v1198, %v1206
        %v1213 = vsel %vm665, %v1200, %v1208
        %v1214 = vsel %vm665, %v1202, %v1210
        %1215 = vset.pattern.permute.xlu0 22
        %1216 = vperm.xlu0 %1215, %v802
        %v1217 = vpop.permute.xlu0 %1216
        %1219 = vset.pattern.permute.xlu0 22
        %1220 = vperm.xlu0 %1219, %v803
        %v1221 = vpop.permute.xlu0 %1220
        %1223 = vset.pattern.permute.xlu0 22
        %1224 = vperm.xlu0 %1223, %v804
        %v1225 = vpop.permute.xlu0 %1224
        %1227 = vset.pattern.permute.xlu0 22
        %1228 = vperm.xlu0 %1227, %v805
        %v1229 = vpop.permute.xlu0 %1228
        %v1231 = vmul.f32 %v1211, %v1217
        %v1232 = vmul.f32 %v1212, %v1221
        %v1233 = vmul.f32 %v1213, %v1225
        %v1234 = vmul.f32 %v1214, %v1229
        %v1235 = vadd.f32 %v1191, %v1231
        %v1236 = vadd.f32 %v1192, %v1232
        %v1237 = vadd.f32 %v1193, %v1233
        %v1238 = vadd.f32 %v1194, %v1234
        %1239 = vrot.lane.b32.xlu0 %v923, 96
        %v1240 = vpop.permute.xlu0 %1239
        %1241 = vrot.lane.b32.xlu0 %v925, 96
        %v1242 = vpop.permute.xlu0 %1241
        %1243 = vrot.lane.b32.xlu0 %v927, 96
        %v1244 = vpop.permute.xlu0 %1243
        %1245 = vrot.lane.b32.xlu0 %v929, 96
        %v1246 = vpop.permute.xlu0 %1245
        %1247 = vrot.lane.b32.xlu0 %v924, 96
        %v1248 = vpop.permute.xlu0 %1247
        %1249 = vrot.lane.b32.xlu0 %v926, 96
        %v1250 = vpop.permute.xlu0 %1249
        %1251 = vrot.lane.b32.xlu0 %v928, 96
        %v1252 = vpop.permute.xlu0 %1251
        %1253 = vrot.lane.b32.xlu0 %v930, 96
        %v1254 = vpop.permute.xlu0 %1253
        %v1255 = vsel %vm665, %v1240, %v1248
        %v1256 = vsel %vm665, %v1242, %v1250
        %v1257 = vsel %vm665, %v1244, %v1252
        %v1258 = vsel %vm665, %v1246, %v1254
        %1259 = vset.pattern.permute.xlu0 23
        %1260 = vperm.xlu0 %1259, %v802
        %v1261 = vpop.permute.xlu0 %1260
        %1263 = vset.pattern.permute.xlu0 23
        %1264 = vperm.xlu0 %1263, %v803
        %v1265 = vpop.permute.xlu0 %1264
        %1267 = vset.pattern.permute.xlu0 23
        %1268 = vperm.xlu0 %1267, %v804
        %v1269 = vpop.permute.xlu0 %1268
        %1271 = vset.pattern.permute.xlu0 23
        %1272 = vperm.xlu0 %1271, %v805
        %v1273 = vpop.permute.xlu0 %1272
        %v1275 = vmul.f32 %v1255, %v1261
        %v1276 = vmul.f32 %v1256, %v1265
        %v1277 = vmul.f32 %v1257, %v1269
        %v1278 = vmul.f32 %v1258, %v1273
        %v1279 = vadd.f32 %v1235, %v1275
        %v1280 = vadd.f32 %v1236, %v1276
        %v1281 = vadd.f32 %v1237, %v1277
        %v1282 = vadd.f32 %v1238, %v1278
        %1283 = vrot.lane.b32.xlu0 %v987, 96
        %v1284 = vpop.permute.xlu0 %1283
        %1285 = vrot.lane.b32.xlu0 %v989, 96
        %v1286 = vpop.permute.xlu0 %1285
        %1287 = vrot.lane.b32.xlu0 %v991, 96
        %v1288 = vpop.permute.xlu0 %1287
        %1289 = vrot.lane.b32.xlu0 %v993, 96
        %v1290 = vpop.permute.xlu0 %1289
        %1291 = vrot.lane.b32.xlu0 %v988, 96
        %v1292 = vpop.permute.xlu0 %1291
        %1293 = vrot.lane.b32.xlu0 %v990, 96
        %v1294 = vpop.permute.xlu0 %1293
        %1295 = vrot.lane.b32.xlu0 %v992, 96
        %v1296 = vpop.permute.xlu0 %1295
        %1297 = vrot.lane.b32.xlu0 %v994, 96
        %v1298 = vpop.permute.xlu0 %1297
        %v1299 = vsel %vm665, %v1284, %v1292
        %v1300 = vsel %vm665, %v1286, %v1294
        %v1301 = vsel %vm665, %v1288, %v1296
        %v1302 = vsel %vm665, %v1290, %v1298
        %1303 = vset.pattern.permute.xlu0 24
        %1304 = vperm.xlu0 %1303, %v802
        %v1305 = vpop.permute.xlu0 %1304
        %1307 = vset.pattern.permute.xlu0 24
        %1308 = vperm.xlu0 %1307, %v803
        %v1309 = vpop.permute.xlu0 %1308
        %1311 = vset.pattern.permute.xlu0 24
        %1312 = vperm.xlu0 %1311, %v804
        %v1313 = vpop.permute.xlu0 %1312
        %1315 = vset.pattern.permute.xlu0 24
        %1316 = vperm.xlu0 %1315, %v805
        %v1317 = vpop.permute.xlu0 %1316
        %v1319 = vmul.f32 %v1299, %v1305
        %v1320 = vmul.f32 %v1300, %v1309
        %v1321 = vmul.f32 %v1301, %v1313
        %v1322 = vmul.f32 %v1302, %v1317
        %v1323 = vadd.f32 %v1279, %v1319
        %v1324 = vadd.f32 %v1280, %v1320
        %v1325 = vadd.f32 %v1281, %v1321
        %v1326 = vadd.f32 %v1282, %v1322
        %1327 = vset.pattern.permute.xlu0 26
        %1328 = vperm.xlu0 %1327, %v802
        %v1329 = vpop.permute.xlu0 %1328
        %1331 = vset.pattern.permute.xlu0 26
        %1332 = vperm.xlu0 %1331, %v803
        %v1333 = vpop.permute.xlu0 %1332
        %1335 = vset.pattern.permute.xlu0 26
        %1336 = vperm.xlu0 %1335, %v804
        %v1337 = vpop.permute.xlu0 %1336
        %1339 = vset.pattern.permute.xlu0 26
        %1340 = vperm.xlu0 %1339, %v805
        %v1341 = vpop.permute.xlu0 %1340
        %v1343 = vadd.f32 %v1323, %v1329
        %v1344 = vadd.f32 %v1324, %v1333
        %v1345 = vadd.f32 %v1325, %v1337
        %v1346 = vadd.f32 %v1326, %v1341
        %v1347 = vmul.f32 %v798, 0.5
        %v1348 = vmul.f32 %v799, 0.5
        %v1349 = vmul.f32 %v800, 0.5
        %v1350 = vmul.f32 %v801, 0.5
        %v1351 = vmul.f32 %v798, 0.70710677
        %v1352 = vmul.f32 %v799, 0.70710677
        %v1353 = vmul.f32 %v800, 0.70710677
        %v1354 = vmul.f32 %v801, 0.70710677
        %v1355 = verf.f32.pop %v1351
        %v1356 = verf.f32.pop %v1352
        %v1357 = verf.f32.pop %v1353
        %v1358 = verf.f32.pop %v1354
        %v1359 = vadd.f32 %v1355, 1.0
        %v1360 = vadd.f32 %v1356, 1.0
        %v1361 = vadd.f32 %v1357, 1.0
        %v1362 = vadd.f32 %v1358, 1.0
        %v1363 = vmul.f32 %v1347, %v1359
        %v1364 = vmul.f32 %v1348, %v1360
        %v1365 = vmul.f32 %v1349, %v1361
        %v1366 = vmul.f32 %v1350, %v1362
        %v1367 = vmul.f32 %v1363, %v1343
        %v1368 = vmul.f32 %v1364, %v1344
        %v1369 = vmul.f32 %v1365, %v1345
        %v1370 = vmul.f32 %v1366, %v1346
        %1371 = vst [vmem:[%s183] sm:$0xff] %v1367
        %1372 = vst [vmem:[%s183 + $0x8] sm:$0xff] %v1368
        %1373 = vst [vmem:[%s183 + $0x10] sm:$0xff] %v1369
        %1374 = vst [vmem:[%s183 + $0x18] sm:$0xff] %v1370
        %s1375 = sand.u32 %s106, 1
        %s1376 = sand.u32 %s106, 1
        %s1377 = smul.addr %s1376, 32
        %s1378 = scalar_lea.vmem [#allocation2], %s1377
        // Predicated region
        $region33: #{gated_qdwconv.1} parent=31 // pred_check
          %p1379 = pneg %p116
        $region34: #{gated_qdwconv.1} parent=31 // pred_check_branch
          %1381 = sbr.rel (%p1379) target = $region36
        $region35: #{gated_qdwconv.1} parent=31 // pred_region
          %s1382 = smul.addr %s18, 8
          %s1383 = sadd.s32 %s19, %s1382
          %s1384 = smul.addr %s1383, 8
          %s1385 = scalar_lea.vmem %s3, %s1384
          // Predicated region
          $region37: #{gated_qdwconv.1} parent=35 // pred_check
            _
          $region38: #{gated_qdwconv.1} parent=35 // pred_check_branch
            %1387 = sbr.rel (0) target = $region40
          $region39: #{gated_qdwconv.1} parent=35 // pred_region
            // Predicated region
            $region41: #{gated_qdwconv.1} parent=39 // pred_check
              _
            $region42: #{gated_qdwconv.1} parent=39 // pred_check_branch
              %1389 = sbr.rel (0) target = $region44
            $region43: #{gated_qdwconv.1} parent=39 // pred_region
              // Predicated region
              $region56: #{gated_qdwconv.1} parent=43 // pred_check
                _
              $region57: #{gated_qdwconv.1} parent=43 // pred_check_branch
                %1410 = sbr.rel (0) target = $region59
              $region58: #{gated_qdwconv.1} parent=43 // pred_region
                loop: start=0, step=1, limit=1
                $region60: #{gated_qdwconv.1} parent=58 // loop_pre_header
                  _
                $region61: #{gated_qdwconv.1} parent=58 // loop_header
                  %s1412 = sphi 0, %s1416
                  %p1413 = scmp.ge.s32.totalorder %s1412, 1
                  %s1417 = sphi %s1378, %s1378
                  %s1418 = sphi %s1385, %s1385
                $region62: #{gated_qdwconv.1} parent=58 // loop_header_branch
                  %1415 = sbr.rel (%p1413) target = $region66
                $region63: #{gated_qdwconv.1} parent=58 // loop_body
                  %v1419 = vld [vmem:[%s1417] sm:$0xff]
                  %1420 = vst [vmem:[%s1418] sm:$0xff] %v1419
                  %v1421 = vld [vmem:[%s1417 + $0x8] sm:$0xff]
                  %1422 = vst [vmem:[%s1418 + $0x10] sm:$0xff] %v1421
                  %v1423 = vld [vmem:[%s1417 + $0x10] sm:$0xff]
                  %1424 = vst [vmem:[%s1418 + $0x20] sm:$0xff] %v1423
                  %v1425 = vld [vmem:[%s1417 + $0x18] sm:$0xff]
                  %1426 = vst [vmem:[%s1418 + $0x30] sm:$0xff] %v1425
                $region64: #{gated_qdwconv.1} parent=58 // loop_footer
                  %s1416 = sadd.s32 1, %s1412
                $region65: #{gated_qdwconv.1} parent=58 // loop_footer_branch
                  %1411 = sbr.rel target = $region61
                $region66: #{gated_qdwconv.1} parent=58 // loop_exit
                  _
              $region59: #{gated_qdwconv.1} parent=43 // pred_fallthru
                _
              // Predicated region
              $region67: #{gated_qdwconv.1} parent=43 // pred_check
                _
              $region68: #{gated_qdwconv.1} parent=43 // pred_check_branch
                %1428 = sbr.rel target = $region70
              $region69: #{gated_qdwconv.1} parent=43 // pred_region
                _
              $region70: #{gated_qdwconv.1} parent=43 // pred_fallthru
                _
            $region44: #{gated_qdwconv.1} parent=39 // pred_fallthru
              _
            // Predicated region
            $region45: #{gated_qdwconv.1} parent=39 // pred_check
              _
            $region46: #{gated_qdwconv.1} parent=39 // pred_check_branch
              %1391 = sbr.rel target = $region48
            $region47: #{gated_qdwconv.1} parent=39 // pred_region
              loop: start=0, step=1, limit=1
              $region49: #{gated_qdwconv.1} parent=47 // loop_pre_header
                _
              $region50: #{gated_qdwconv.1} parent=47 // loop_header
                %s1394 = sphi 0, %s1398
                %p1395 = scmp.ge.s32.totalorder %s1394, 1
                %s1399 = sphi %s1378, %s1378
                %s1400 = sphi %s1385, %s1385
              $region51: #{gated_qdwconv.1} parent=47 // loop_header_branch
                %1397 = sbr.rel (%p1395) target = $region55
              $region52: #{gated_qdwconv.1} parent=47 // loop_body
                %v1401 = vld [vmem:[%s1399] sm:$0xff]
                %1402 = vst [vmem:[%s1400] sm:$0xff] %v1401
                %v1403 = vld [vmem:[%s1399 + $0x8] sm:$0xff]
                %1404 = vst [vmem:[%s1400 + $0x10] sm:$0xff] %v1403
                %v1405 = vld [vmem:[%s1399 + $0x10] sm:$0xff]
                %1406 = vst [vmem:[%s1400 + $0x20] sm:$0xff] %v1405
                %v1407 = vld [vmem:[%s1399 + $0x18] sm:$0xff]
                %1408 = vst [vmem:[%s1400 + $0x30] sm:$0xff] %v1407
              $region53: #{gated_qdwconv.1} parent=47 // loop_footer
                %s1398 = sadd.s32 1, %s1394
              $region54: #{gated_qdwconv.1} parent=47 // loop_footer_branch
                %1393 = sbr.rel target = $region50
              $region55: #{gated_qdwconv.1} parent=47 // loop_exit
                _
            $region48: #{gated_qdwconv.1} parent=39 // pred_fallthru
              _
          $region40: #{gated_qdwconv.1} parent=35 // pred_fallthru
            _
          %1429 = vnop
        $region36: #{gated_qdwconv.1} parent=31 // pred_fallthru
          _
      $region32: #{gated_qdwconv.1} parent=5 // pred_fallthru
        _
      %p1430 = scmp.le.s32.totalorder 2, %s9
      // Predicated region
      $region71: #{gated_qdwconv.1} parent=5 // pred_check
        %p1431 = pneg %p1430
      $region72: #{gated_qdwconv.1} parent=5 // pred_check_branch
        %1433 = sbr.rel (%p1431) target = $region74
      $region73: #{gated_qdwconv.1} parent=5 // pred_region
        %s1434 = ssub.s32 %s9, 2
        // Predicated region
        $region75: #{gated_qdwconv.1} parent=73 // pred_check
          %p1435 = pneg %p122
        $region76: #{gated_qdwconv.1} parent=73 // pred_check_branch
          %1437 = sbr.rel (%p1435) target = $region78
        $region77: #{gated_qdwconv.1} parent=73 // pred_region
          %s1438 = sand.u32 %s107, 1
          %s1439 = sand.u32 %s107, 1
          %s1440 = smul.addr %s1439, 32
          %s1441 = scalar_lea.vmem [#allocation2], %s1440
        $region78: #{gated_qdwconv.1} parent=73 // pred_fallthru
          _
      $region74: #{gated_qdwconv.1} parent=5 // pred_fallthru
        _
    $region6: #{gated_qdwconv.1} parent=1 // loop_footer
      %s13 = sadd.s32 1, %s9
    $region7: #{gated_qdwconv.1} parent=1 // loop_footer_branch
      %8 = sbr.rel target = $region3
    $region8: #{gated_qdwconv.1} parent=1 // loop_exit
      _

</llo_original>
